<compile_context>
chip_gen: v7x
topology: tpu7x:2x2x1
jax: 0.10.0
libtpu: 0.0.40
codegen_flags: <defaults>
</compile_context>

<pallas_src>
import math
import functools

import jax
import jax.numpy as jnp
from jax import lax
from jax.experimental import pallas as pl
from jax.experimental.pallas import tpu as pltpu

_MASK = -1e30  # large finite negative (avoids -inf - -inf NaNs in online softmax)


def _layernorm(x, w, b, eps=1e-5):
    mu = jnp.mean(x, axis=-1, keepdims=True)
    var = jnp.mean(jnp.square(x - mu), axis=-1, keepdims=True)
    return (x - mu) * lax.rsqrt(var + eps) * w + b


def _gelu_tanh(x):
    c = math.sqrt(2.0 / math.pi)
    return 0.5 * x * (1.0 + jnp.tanh(c * (x + 0.044715 * x * x * x)))


def block_kernel(
    x_ref,                       # (1, T, C)   f32  full sequence of this batch elt
    ln1w_ref, ln1b_ref,          # (1, C)      f32
    wq_ref, bq_ref,              # (C, C) bf16 ; (1, C)  f32
    wkv_ref, bkv_ref,            # (C, 2C) bf16; (1, 2C) f32
    wo3_ref, bo_ref,             # (H, Dh, C) bf16; (1, C) f32
    ln2w_ref, ln2b_ref,          # (1, C)      f32
    wfc_ref, bfc_ref,            # (C, 4C) bf16; (1, 4C) f32
    wpr_ref, bpr_ref,            # (4C, C) bf16; (1, C)  f32
    out_ref,                     # (1, TQ, C)  f32
    k_scr, v_scr,                # (H, T, Dh) bf16 scratch; persists across q-blocks
    m_scr, l_scr, acc_scr,       # online-softmax state (TQ,1),(TQ,1),(TQ,Dh) f32
    *, n_head,
):
    qi = pl.program_id(1)
    T, C = x_ref.shape[1], x_ref.shape[2]
    TQ = out_ref.shape[1]
    TK = TQ
    H = n_head
    Dh = C // H
    scale = 1.0 / math.sqrt(Dh)

    ln1w = ln1w_ref[0]
    ln1b = ln1b_ref[0]

    # ---- K/V projection: once per batch element, stored head-major in VMEM ----
    @pl.when(qi == 0)
    def _():
        x_full = x_ref[0]                                          # (T, C) f32
        xn = _layernorm(x_full, ln1w, ln1b)
        kvp = jnp.dot(xn.astype(jnp.bfloat16), wkv_ref[...],
                      preferred_element_type=jnp.float32) + bkv_ref[0]   # (T, 2C)
        for h in range(H):      # one-time layout staging, amortized over all q-blocks
            k_scr[h] = kvp[:, h * Dh:(h + 1) * Dh].astype(jnp.bfloat16)
            v_scr[h] = kvp[:, C + h * Dh: C + (h + 1) * Dh].astype(jnp.bfloat16)

    # ---- this query block ----
    q_start = pl.multiple_of(qi * TQ, TQ)
    x_q = x_ref[0, pl.ds(q_start, TQ), :]                          # (TQ, C) f32
    xn_q = _layernorm(x_q, ln1w, ln1b)
    q_full = jnp.dot(xn_q.astype(jnp.bfloat16), wq_ref[...],
                     preferred_element_type=jnp.float32) + bq_ref[0]
    q_full = q_full * scale            # fold 1/sqrt(Dh) once, in f32

    # hoisted causal mask for the diagonal KV tile
    row = lax.broadcasted_iota(jnp.int32, (TQ, TK), 0)
    col = lax.broadcasted_iota(jnp.int32, (TQ, TK), 1)
    tri = row >= col

    att = jnp.zeros((TQ, C), jnp.float32)

    for h in range(H):
        q_h = q_full[:, h * Dh:(h + 1) * Dh].astype(jnp.bfloat16)  # (TQ, Dh)

        m_scr[...] = jnp.full((TQ, 1), _MASK, jnp.float32)
        l_scr[...] = jnp.zeros((TQ, 1), jnp.float32)
        acc_scr[...] = jnp.zeros((TQ, Dh), jnp.float32)

        # flash-style online softmax over KV tiles; tiles above the causal
        # diagonal are never visited (loop bound qi + 1).
        @pl.loop(0, qi + 1)
        def _(kv_i):
            start = pl.multiple_of(kv_i * TK, TK)
            k_t = k_scr[h, pl.ds(start, TK), :]                    # (TK, Dh) bf16
            v_t = v_scr[h, pl.ds(start, TK), :]
            # contract last dims (no explicit kh.T / XLU transpose)
            s = lax.dot_general(q_h, k_t, (((1,), (1,)), ((), ())),
                                preferred_element_type=jnp.float32)  # (TQ, TK)
            s = jnp.where(jnp.logical_or(kv_i < qi, tri), s, _MASK)

            m_p = m_scr[...]
            m_n = jnp.maximum(m_p, jnp.max(s, axis=-1, keepdims=True))
            alpha = jnp.exp(m_p - m_n)
            p = jnp.exp(s - m_n)
            l_scr[...] = alpha * l_scr[...] + jnp.sum(p, axis=-1, keepdims=True)
            acc_scr[...] = alpha * acc_scr[...] + jnp.dot(
                p.astype(jnp.bfloat16), v_t, preferred_element_type=jnp.float32)
            m_scr[...] = m_n

        y_h = acc_scr[...] * pl.reciprocal(l_scr[...], approx=True)  # (TQ, Dh) f32
        # fold the output projection per head: full-width (TQ, C) accumulation,
        # no narrow masked stores.
        att = att + jnp.dot(y_h.astype(jnp.bfloat16), wo3_ref[h],
                            preferred_element_type=jnp.float32)

    x1 = x_q + att + bo_ref[0]

    # ---- MLP branch: x1 + c_proj(gelu(c_fc(ln_2(x1)))) ----
    xn2 = _layernorm(x1, ln2w_ref[0], ln2b_ref[0])
    hdn = jnp.dot(xn2.astype(jnp.bfloat16), wfc_ref[...],
                  preferred_element_type=jnp.float32) + bfc_ref[0]
    hdn = _gelu_tanh(hdn)                                         # f32 (EUP tanh)
    mlp = jnp.dot(hdn.astype(jnp.bfloat16), wpr_ref[...],
                  preferred_element_type=jnp.float32) + bpr_ref[0]

    out_ref[0] = x1 + mlp


def gpt2_block(x, params, n_head):
    B, T, C = x.shape
    (ln1w, ln1b, wqkv, bqkv, wo, bo, ln2w, ln2b, wfc, bfc, wpr, bpr) = params
    H = n_head
    assert C % H == 0
    Dh = C // H

    # query / kv tile size along the sequence
    TQ = 128 if (T % 128 == 0) else T
    NQ = T // TQ
    assert NQ * TQ == T

    bf16 = jnp.bfloat16
    # Split / head-split / cast weights once in the wrapper (free at trace time;
    # in a real model these would be cached).  bf16 only for MXU operands.
    wq = wqkv[:, :C].astype(bf16)
    wkv = wqkv[:, C:].astype(bf16)
    bq = bqkv[:, :C]
    bkv = bqkv[:, C:]
    wo3 = wo.astype(bf16).reshape(H, Dh, C)          # per-head c_proj slices
    wfc_b = wfc.astype(bf16)
    wpr_b = wpr.astype(bf16)
    # TODO(synk): for very large C on v7x (64 MiB VMEM), additionally K/N-tile
    # wfc/wpr over a reduction grid axis instead of keeping them fully resident.

    weight_args = (ln1w, ln1b, wq, bq, wkv, bkv, wo3, bo,
                   ln2w, ln2b, wfc_b, bfc, wpr_b, bpr)

    def full_spec(a):
        return pl.BlockSpec(a.shape, lambda b, q: (0,) * a.ndim)

    grid_spec = pltpu.PrefetchScalarGridSpec(
        num_scalar_prefetch=0,
        grid=(B, NQ),
        in_specs=[pl.BlockSpec((1, T, C), lambda b, q: (b, 0, 0))]
        + [full_spec(a) for a in weight_args],
        out_specs=pl.BlockSpec((1, TQ, C), lambda b, q: (b, q, 0)),
        scratch_shapes=[
            pltpu.VMEM((H, T, Dh), bf16),          # K, head-major, reused across q-blocks
            pltpu.VMEM((H, T, Dh), bf16),          # V, head-major
            pltpu.VMEM((TQ, 1), jnp.float32),      # online-softmax running max
            pltpu.VMEM((TQ, 1), jnp.float32),      # online-softmax running sum
            pltpu.VMEM((TQ, Dh), jnp.float32),     # attention accumulator
        ],
    )

    weight_bytes = sum(a.size * a.dtype.itemsize for a in weight_args)
    cost = pl.CostEstimate(
        flops=int(24 * B * T * C * C + 4 * B * T * T * C),
        transcendentals=int(B * H * T * T // 2 + 4 * B * T * C),
        bytes_accessed=int(8 * B * T * C + weight_bytes),
    )

    # scoped VMEM sized from the actual footprint (resident weights + x slab +
    # output block, double-buffered inputs, scratch, live intermediates),
    # clamped to stay well under v5e/v6e physical VMEM.
    resident = 2 * weight_bytes + 2 * (T * C * 4) + 2 * (TQ * C * 4)
    scratch = 2 * H * T * Dh * 2 + (TQ * (Dh + 2)) * 4
    live = T * 2 * C * 4 + 2 * TQ * 4 * C * 4
    vmem_limit = int(min(100 * 2**20,
                         max(32 * 2**20, resident + scratch + live + (4 << 20))))

    return pl.pallas_call(
        functools.partial(block_kernel, n_head=n_head),
        grid_spec=grid_spec,
        out_shape=jax.ShapeDtypeStruct((B, T, C), jnp.float32),
        compiler_params=pltpu.CompilerParams(
            # B is parallel (megacore / v7x 2-TC); the q-block axis must stay
            # "arbitrary" because the K/V scratch is filled at qi==0 and reused.
            dimension_semantics=("parallel", "arbitrary"),
            vmem_limit_bytes=vmem_limit,
        ),
        cost_estimate=cost,
    )(x, *weight_args)


# ---------------- pure-JAX reference for sanity checking ----------------
def gpt2_block_ref(x, params, n_head):
    (ln1w, ln1b, wqkv, bqkv, wo, bo, ln2w, ln2b, wfc, bfc, wpr, bpr) = params
    B, T, C = x.shape
    Dh = C // n_head

    def ln(h, w, b):
        mu = jnp.mean(h, -1, keepdims=True)
        var = jnp.mean((h - mu) ** 2, -1, keepdims=True)
        return (h - mu) * jax.lax.rsqrt(var + 1e-5) * w[0] + b[0]

    xn = ln(x, ln1w, ln1b)
    qkv = xn @ wqkv + bqkv[0]
    q, k, v = jnp.split(qkv, 3, axis=-1)
    q = q.reshape(B, T, n_head, Dh).transpose(0, 2, 1, 3)
    k = k.reshape(B, T, n_head, Dh).transpose(0, 2, 1, 3)
    v = v.reshape(B, T, n_head, Dh).transpose(0, 2, 1, 3)
    s = jnp.einsum("bhtd,bhsd->bhts", q, k) / math.sqrt(Dh)
    mask = jnp.tril(jnp.ones((T, T), bool))
    s = jnp.where(mask, s, -jnp.inf)
    p = jax.nn.softmax(s, axis=-1)
    y = jnp.einsum("bhts,bhsd->bhtd", p, v).transpose(0, 2, 1, 3).reshape(B, T, C)
    x = x + (y @ wo + bo[0])
    xn2 = ln(x, ln2w, ln2b)
    h = xn2 @ wfc + bfc[0]
    h = 0.5 * h * (1.0 + jnp.tanh(math.sqrt(2.0 / math.pi) * (h + 0.044715 * h ** 3)))
    return x + (h @ wpr + bpr[0])


if __name__ == "__main__":
    B, T, C, n_head = 2, 8, 32, 4

    key = jax.random.PRNGKey(0)
    keys = jax.random.split(key, 8)

    x = jax.random.normal(keys[0], (B, T, C), jnp.float32)

    std = 0.02
    ln1w = jnp.ones((1, C), jnp.float32)
    ln1b = jnp.zeros((1, C), jnp.float32)
    ln2w = jnp.ones((1, C), jnp.float32)
    ln2b = jnp.zeros((1, C), jnp.float32)
    wqkv = std * jax.random.normal(keys[1], (C, 3 * C), jnp.float32)
    bqkv = std * jax.random.normal(keys[2], (1, 3 * C), jnp.float32)
    wo = std * jax.random.normal(keys[3], (C, C), jnp.float32)
    bo = std * jax.random.normal(keys[4], (1, C), jnp.float32)
    wfc = std * jax.random.normal(keys[5], (C, 4 * C), jnp.float32)
    bfc = std * jax.random.normal(keys[6], (1, 4 * C), jnp.float32)
    wpr = std * jax.random.normal(keys[7], (4 * C, C), jnp.float32)
    bpr = jnp.zeros((1, C), jnp.float32)

    params = (ln1w, ln1b, wqkv, bqkv, wo, bo, ln2w, ln2b, wfc, bfc, wpr, bpr)

    out = gpt2_block(x, params, n_head)
    out = jax.block_until_ready(out)

    ref = jax.block_until_ready(gpt2_block_ref(x, params, n_head))
    assert out.shape == (B, T, C)
    assert jnp.allclose(out, ref, atol=2e-2, rtol=2e-2), "mismatch vs reference"

    print("KERNEL_OK")
</pallas_src>

<mosaic_0001>
module attributes {stable_mosaic.version = 11 : i64} {
  func.func @block_kernel(%arg0: i32, %arg1: i32, %arg2: memref<1x8x32xf32, #tpu.memory_space<vmem>>, %arg3: memref<1x32xf32, #tpu.memory_space<vmem>>, %arg4: memref<1x32xf32, #tpu.memory_space<vmem>>, %arg5: memref<32x32xbf16, #tpu.memory_space<vmem>>, %arg6: memref<1x32xf32, #tpu.memory_space<vmem>>, %arg7: memref<32x64xbf16, #tpu.memory_space<vmem>>, %arg8: memref<1x64xf32, #tpu.memory_space<vmem>>, %arg9: memref<4x8x32xbf16, #tpu.memory_space<vmem>>, %arg10: memref<1x32xf32, #tpu.memory_space<vmem>>, %arg11: memref<1x32xf32, #tpu.memory_space<vmem>>, %arg12: memref<1x32xf32, #tpu.memory_space<vmem>>, %arg13: memref<32x128xbf16, #tpu.memory_space<vmem>>, %arg14: memref<1x128xf32, #tpu.memory_space<vmem>>, %arg15: memref<128x32xbf16, #tpu.memory_space<vmem>>, %arg16: memref<1x32xf32, #tpu.memory_space<vmem>>, %arg17: memref<1x8x32xf32, #tpu.memory_space<vmem>>, %arg18: memref<4x8x8xbf16, #tpu.memory_space<vmem>>, %arg19: memref<4x8x8xbf16, #tpu.memory_space<vmem>>, %arg20: memref<8x1xf32, #tpu.memory_space<vmem>>, %arg21: memref<8x1xf32, #tpu.memory_space<vmem>>, %arg22: memref<8x8xf32, #tpu.memory_space<vmem>>) attributes {dimension_semantics = [#tpu.dimension_semantics<parallel>, #tpu.dimension_semantics<arbitrary>], iteration_bounds = array<i64: 2, 1>, scalar_prefetch = 0 : i64, scratch_operands = 5 : i64, tpu.core_type = #tpu.core_type<tc>, window_params = [{transform_indices = @transform_0, window_bounds = array<i64: 1, 8, 32>}, {pipeline_mode = #tpu.pipeline_mode<synchronous>, transform_indices = @transform_1, window_bounds = array<i64: 1, 32>}, {pipeline_mode = #tpu.pipeline_mode<synchronous>, transform_indices = @transform_2, window_bounds = array<i64: 1, 32>}, {pipeline_mode = #tpu.pipeline_mode<synchronous>, transform_indices = @transform_3, window_bounds = array<i64: 32, 32>}, {pipeline_mode = #tpu.pipeline_mode<synchronous>, transform_indices = @transform_4, window_bounds = array<i64: 1, 32>}, {pipeline_mode = #tpu.pipeline_mode<synchronous>, transform_indices = @transform_5, window_bounds = array<i64: 32, 64>}, {pipeline_mode = #tpu.pipeline_mode<synchronous>, transform_indices = @transform_6, window_bounds = array<i64: 1, 64>}, {pipeline_mode = #tpu.pipeline_mode<synchronous>, transform_indices = @transform_7, window_bounds = array<i64: 4, 8, 32>}, {pipeline_mode = #tpu.pipeline_mode<synchronous>, transform_indices = @transform_8, window_bounds = array<i64: 1, 32>}, {pipeline_mode = #tpu.pipeline_mode<synchronous>, transform_indices = @transform_9, window_bounds = array<i64: 1, 32>}, {pipeline_mode = #tpu.pipeline_mode<synchronous>, transform_indices = @transform_10, window_bounds = array<i64: 1, 32>}, {pipeline_mode = #tpu.pipeline_mode<synchronous>, transform_indices = @transform_11, window_bounds = array<i64: 32, 128>}, {pipeline_mode = #tpu.pipeline_mode<synchronous>, transform_indices = @transform_12, window_bounds = array<i64: 1, 128>}, {pipeline_mode = #tpu.pipeline_mode<synchronous>, transform_indices = @transform_13, window_bounds = array<i64: 128, 32>}, {pipeline_mode = #tpu.pipeline_mode<synchronous>, transform_indices = @transform_14, window_bounds = array<i64: 1, 32>}, {transform_indices = @transform_15, window_bounds = array<i64: 1, 8, 32>}]} {
    %c0 = arith.constant 0 : index
    %c0_0 = arith.constant 0 : index
    %0 = vector.load %arg3[%c0, %c0_0] : memref<1x32xf32, #tpu.memory_space<vmem>>, vector<1x32xf32>
    %1 = vector.shape_cast %0 : vector<1x32xf32> to vector<32xf32>
    %c0_1 = arith.constant 0 : index
    %c0_2 = arith.constant 0 : index
    %2 = vector.load %arg4[%c0_1, %c0_2] : memref<1x32xf32, #tpu.memory_space<vmem>>, vector<1x32xf32>
    %3 = vector.shape_cast %2 : vector<1x32xf32> to vector<32xf32>
    %c0_i32 = arith.constant 0 : i32
    %4 = arith.cmpi eq, %arg1, %c0_i32 : i32
    %5 = arith.extui %4 : i1 to i32
    %c0_i32_3 = arith.constant 0 : i32
    %6 = arith.cmpi ne, %5, %c0_i32_3 : i32
    scf.if %6 {
      %c0_145 = arith.constant 0 : index
      %c0_146 = arith.constant 0 : index
      %c0_147 = arith.constant 0 : index
      %217 = vector.load %arg2[%c0_145, %c0_146, %c0_147] : memref<1x8x32xf32, #tpu.memory_space<vmem>>, vector<1x8x32xf32>
      %218 = vector.shape_cast %217 : vector<1x8x32xf32> to vector<8x32xf32>
      %cst_148 = arith.constant dense<0.000000e+00> : vector<8xf32>
      %219 = vector.multi_reduction <add>, %218, %cst_148 [1] : vector<8x32xf32> to vector<8xf32>
      %220 = vector.shape_cast %219 : vector<8xf32> to vector<8x1xf32>
      %cst_149 = arith.constant 3.200000e+01 : f32
      %221 = vector.broadcast %cst_149 : f32 to vector<8x1xf32>
      %222 = arith.divf %220, %221 : vector<8x1xf32>
      %223 = vector.broadcast %222 : vector<8x1xf32> to vector<8x32xf32>
      %224 = arith.subf %218, %223 : vector<8x32xf32>
      %225 = arith.mulf %224, %224 : vector<8x32xf32>
      %cst_150 = arith.constant dense<0.000000e+00> : vector<8xf32>
      %226 = vector.multi_reduction <add>, %225, %cst_150 [1] : vector<8x32xf32> to vector<8xf32>
      %227 = vector.shape_cast %226 : vector<8xf32> to vector<8x1xf32>
      %cst_151 = arith.constant 3.200000e+01 : f32
      %228 = vector.broadcast %cst_151 : f32 to vector<8x1xf32>
      %229 = arith.divf %227, %228 : vector<8x1xf32>
      %230 = vector.broadcast %222 : vector<8x1xf32> to vector<8x32xf32>
      %231 = arith.subf %218, %230 : vector<8x32xf32>
      %cst_152 = arith.constant 9.99999974E-6 : f32
      %232 = vector.broadcast %cst_152 : f32 to vector<8x1xf32>
      %233 = arith.addf %229, %232 : vector<8x1xf32>
      %234 = math.rsqrt %233 : vector<8x1xf32>
      %235 = vector.broadcast %234 : vector<8x1xf32> to vector<8x32xf32>
      %236 = arith.mulf %231, %235 : vector<8x32xf32>
      %237 = vector.shape_cast %1 : vector<32xf32> to vector<1x32xf32>
      %238 = vector.broadcast %237 : vector<1x32xf32> to vector<8x32xf32>
      %239 = arith.mulf %236, %238 : vector<8x32xf32>
      %240 = vector.shape_cast %3 : vector<32xf32> to vector<1x32xf32>
      %241 = vector.broadcast %240 : vector<1x32xf32> to vector<8x32xf32>
      %242 = arith.addf %239, %241 : vector<8x32xf32>
      %243 = arith.truncf %242 : vector<8x32xf32> to vector<8x32xbf16>
      %c0_153 = arith.constant 0 : index
      %c0_154 = arith.constant 0 : index
      %244 = vector.load %arg7[%c0_153, %c0_154] : memref<32x64xbf16, #tpu.memory_space<vmem>>, vector<32x64xbf16>
      %cst_155 = arith.constant dense<0.000000e+00> : vector<8x64xf32>
      %245 = tpu.matmul %243, %244, %cst_155 {dimension_numbers = #tpu.dot_dimension_numbers<[1], [0], [0], [1], [0, 0, 1, 1], [], []>} : vector<8x32xbf16>, vector<32x64xbf16>, vector<8x64xf32> -> vector<8x64xf32>
      %c0_156 = arith.constant 0 : index
      %c0_157 = arith.constant 0 : index
      %246 = vector.load %arg8[%c0_156, %c0_157] : memref<1x64xf32, #tpu.memory_space<vmem>>, vector<1x64xf32>
      %247 = vector.shape_cast %246 : vector<1x64xf32> to vector<64xf32>
      %248 = vector.shape_cast %247 : vector<64xf32> to vector<1x64xf32>
      %249 = vector.broadcast %248 : vector<1x64xf32> to vector<8x64xf32>
      %250 = arith.addf %245, %249 : vector<8x64xf32>
      %251 = vector.extract_strided_slice %250 {offsets = [0, 0], sizes = [8, 8], strides = [1, 1]} : vector<8x64xf32> to vector<8x8xf32>
      %252 = arith.truncf %251 : vector<8x8xf32> to vector<8x8xbf16>
      %c0_158 = arith.constant 0 : index
      %c0_159 = arith.constant 0 : index
      %c0_160 = arith.constant 0 : index
      %253 = vector.load %arg18[%c0_158, %c0_159, %c0_160] : memref<4x8x8xbf16, #tpu.memory_space<vmem>>, vector<1x8x8xbf16>
      %254 = vector.shape_cast %253 : vector<1x8x8xbf16> to vector<8x8xbf16>
      %255 = vector.shape_cast %252 : vector<8x8xbf16> to vector<1x8x8xbf16>
      tpu.vector_store %arg18[%c0_158, %c0_159, %c0_160], %255 {strides = array<i32>} : memref<4x8x8xbf16, #tpu.memory_space<vmem>>, vector<1x8x8xbf16>,
      %256 = vector.extract_strided_slice %250 {offsets = [0, 32], sizes = [8, 8], strides = [1, 1]} : vector<8x64xf32> to vector<8x8xf32>
      %257 = arith.truncf %256 : vector<8x8xf32> to vector<8x8xbf16>
      %c0_161 = arith.constant 0 : index
      %c0_162 = arith.constant 0 : index
      %c0_163 = arith.constant 0 : index
      %258 = vector.load %arg19[%c0_161, %c0_162, %c0_163] : memref<4x8x8xbf16, #tpu.memory_space<vmem>>, vector<1x8x8xbf16>
      %259 = vector.shape_cast %258 : vector<1x8x8xbf16> to vector<8x8xbf16>
      %260 = vector.shape_cast %257 : vector<8x8xbf16> to vector<1x8x8xbf16>
      tpu.vector_store %arg19[%c0_161, %c0_162, %c0_163], %260 {strides = array<i32>} : memref<4x8x8xbf16, #tpu.memory_space<vmem>>, vector<1x8x8xbf16>,
      %261 = vector.extract_strided_slice %250 {offsets = [0, 8], sizes = [8, 8], strides = [1, 1]} : vector<8x64xf32> to vector<8x8xf32>
      %262 = arith.truncf %261 : vector<8x8xf32> to vector<8x8xbf16>
      %c1_164 = arith.constant 1 : index
      %c0_165 = arith.constant 0 : index
      %c0_166 = arith.constant 0 : index
      %263 = vector.load %arg18[%c1_164, %c0_165, %c0_166] : memref<4x8x8xbf16, #tpu.memory_space<vmem>>, vector<1x8x8xbf16>
      %264 = vector.shape_cast %263 : vector<1x8x8xbf16> to vector<8x8xbf16>
      %265 = vector.shape_cast %262 : vector<8x8xbf16> to vector<1x8x8xbf16>
      tpu.vector_store %arg18[%c1_164, %c0_165, %c0_166], %265 {strides = array<i32>} : memref<4x8x8xbf16, #tpu.memory_space<vmem>>, vector<1x8x8xbf16>,
      %266 = vector.extract_strided_slice %250 {offsets = [0, 40], sizes = [8, 8], strides = [1, 1]} : vector<8x64xf32> to vector<8x8xf32>
      %267 = arith.truncf %266 : vector<8x8xf32> to vector<8x8xbf16>
      %c1_167 = arith.constant 1 : index
      %c0_168 = arith.constant 0 : index
      %c0_169 = arith.constant 0 : index
      %268 = vector.load %arg19[%c1_167, %c0_168, %c0_169] : memref<4x8x8xbf16, #tpu.memory_space<vmem>>, vector<1x8x8xbf16>
      %269 = vector.shape_cast %268 : vector<1x8x8xbf16> to vector<8x8xbf16>
      %270 = vector.shape_cast %267 : vector<8x8xbf16> to vector<1x8x8xbf16>
      tpu.vector_store %arg19[%c1_167, %c0_168, %c0_169], %270 {strides = array<i32>} : memref<4x8x8xbf16, #tpu.memory_space<vmem>>, vector<1x8x8xbf16>,
      %271 = vector.extract_strided_slice %250 {offsets = [0, 16], sizes = [8, 8], strides = [1, 1]} : vector<8x64xf32> to vector<8x8xf32>
      %272 = arith.truncf %271 : vector<8x8xf32> to vector<8x8xbf16>
      %c2_170 = arith.constant 2 : index
      %c0_171 = arith.constant 0 : index
      %c0_172 = arith.constant 0 : index
      %273 = vector.load %arg18[%c2_170, %c0_171, %c0_172] : memref<4x8x8xbf16, #tpu.memory_space<vmem>>, vector<1x8x8xbf16>
      %274 = vector.shape_cast %273 : vector<1x8x8xbf16> to vector<8x8xbf16>
      %275 = vector.shape_cast %272 : vector<8x8xbf16> to vector<1x8x8xbf16>
      tpu.vector_store %arg18[%c2_170, %c0_171, %c0_172], %275 {strides = array<i32>} : memref<4x8x8xbf16, #tpu.memory_space<vmem>>, vector<1x8x8xbf16>,
      %276 = vector.extract_strided_slice %250 {offsets = [0, 48], sizes = [8, 8], strides = [1, 1]} : vector<8x64xf32> to vector<8x8xf32>
      %277 = arith.truncf %276 : vector<8x8xf32> to vector<8x8xbf16>
      %c2_173 = arith.constant 2 : index
      %c0_174 = arith.constant 0 : index
      %c0_175 = arith.constant 0 : index
      %278 = vector.load %arg19[%c2_173, %c0_174, %c0_175] : memref<4x8x8xbf16, #tpu.memory_space<vmem>>, vector<1x8x8xbf16>
      %279 = vector.shape_cast %278 : vector<1x8x8xbf16> to vector<8x8xbf16>
      %280 = vector.shape_cast %277 : vector<8x8xbf16> to vector<1x8x8xbf16>
      tpu.vector_store %arg19[%c2_173, %c0_174, %c0_175], %280 {strides = array<i32>} : memref<4x8x8xbf16, #tpu.memory_space<vmem>>, vector<1x8x8xbf16>,
      %281 = vector.extract_strided_slice %250 {offsets = [0, 24], sizes = [8, 8], strides = [1, 1]} : vector<8x64xf32> to vector<8x8xf32>
      %282 = arith.truncf %281 : vector<8x8xf32> to vector<8x8xbf16>
      %c3_176 = arith.constant 3 : index
      %c0_177 = arith.constant 0 : index
      %c0_178 = arith.constant 0 : index
      %283 = vector.load %arg18[%c3_176, %c0_177, %c0_178] : memref<4x8x8xbf16, #tpu.memory_space<vmem>>, vector<1x8x8xbf16>
      %284 = vector.shape_cast %283 : vector<1x8x8xbf16> to vector<8x8xbf16>
      %285 = vector.shape_cast %282 : vector<8x8xbf16> to vector<1x8x8xbf16>
      tpu.vector_store %arg18[%c3_176, %c0_177, %c0_178], %285 {strides = array<i32>} : memref<4x8x8xbf16, #tpu.memory_space<vmem>>, vector<1x8x8xbf16>,
      %286 = vector.extract_strided_slice %250 {offsets = [0, 56], sizes = [8, 8], strides = [1, 1]} : vector<8x64xf32> to vector<8x8xf32>
      %287 = arith.truncf %286 : vector<8x8xf32> to vector<8x8xbf16>
      %c3_179 = arith.constant 3 : index
      %c0_180 = arith.constant 0 : index
      %c0_181 = arith.constant 0 : index
      %288 = vector.load %arg19[%c3_179, %c0_180, %c0_181] : memref<4x8x8xbf16, #tpu.memory_space<vmem>>, vector<1x8x8xbf16>
      %289 = vector.shape_cast %288 : vector<1x8x8xbf16> to vector<8x8xbf16>
      %290 = vector.shape_cast %287 : vector<8x8xbf16> to vector<1x8x8xbf16>
      tpu.vector_store %arg19[%c3_179, %c0_180, %c0_181], %290 {strides = array<i32>} : memref<4x8x8xbf16, #tpu.memory_space<vmem>>, vector<1x8x8xbf16>,
    } else {
    }
    %c8_i32 = arith.constant 8 : i32
    %7 = arith.muli %arg1, %c8_i32 : i32
    %8 = tpu.assume_multiple %7, 8 : i32
    %c0_4 = arith.constant 0 : index
    %9 = arith.index_cast %8 : i32 to index
    %c0_5 = arith.constant 0 : index
    %10 = vector.load %arg2[%c0_4, %9, %c0_5] : memref<1x8x32xf32, #tpu.memory_space<vmem>>, vector<1x8x32xf32>
    %11 = vector.shape_cast %10 : vector<1x8x32xf32> to vector<8x32xf32>
    %cst = arith.constant dense<0.000000e+00> : vector<8xf32>
    %12 = vector.multi_reduction <add>, %11, %cst [1] : vector<8x32xf32> to vector<8xf32>
    %13 = vector.shape_cast %12 : vector<8xf32> to vector<8x1xf32>
    %cst_6 = arith.constant 3.200000e+01 : f32
    %14 = vector.broadcast %cst_6 : f32 to vector<8x1xf32>
    %15 = arith.divf %13, %14 : vector<8x1xf32>
    %16 = vector.broadcast %15 : vector<8x1xf32> to vector<8x32xf32>
    %17 = arith.subf %11, %16 : vector<8x32xf32>
    %18 = arith.mulf %17, %17 : vector<8x32xf32>
    %cst_7 = arith.constant dense<0.000000e+00> : vector<8xf32>
    %19 = vector.multi_reduction <add>, %18, %cst_7 [1] : vector<8x32xf32> to vector<8xf32>
    %20 = vector.shape_cast %19 : vector<8xf32> to vector<8x1xf32>
    %cst_8 = arith.constant 3.200000e+01 : f32
    %21 = vector.broadcast %cst_8 : f32 to vector<8x1xf32>
    %22 = arith.divf %20, %21 : vector<8x1xf32>
    %23 = vector.broadcast %15 : vector<8x1xf32> to vector<8x32xf32>
    %24 = arith.subf %11, %23 : vector<8x32xf32>
    %cst_9 = arith.constant 9.99999974E-6 : f32
    %25 = vector.broadcast %cst_9 : f32 to vector<8x1xf32>
    %26 = arith.addf %22, %25 : vector<8x1xf32>
    %27 = math.rsqrt %26 : vector<8x1xf32>
    %28 = vector.broadcast %27 : vector<8x1xf32> to vector<8x32xf32>
    %29 = arith.mulf %24, %28 : vector<8x32xf32>
    %30 = vector.shape_cast %1 : vector<32xf32> to vector<1x32xf32>
    %31 = vector.broadcast %30 : vector<1x32xf32> to vector<8x32xf32>
    %32 = arith.mulf %29, %31 : vector<8x32xf32>
    %33 = vector.shape_cast %3 : vector<32xf32> to vector<1x32xf32>
    %34 = vector.broadcast %33 : vector<1x32xf32> to vector<8x32xf32>
    %35 = arith.addf %32, %34 : vector<8x32xf32>
    %36 = arith.truncf %35 : vector<8x32xf32> to vector<8x32xbf16>
    %c0_10 = arith.constant 0 : index
    %c0_11 = arith.constant 0 : index
    %37 = vector.load %arg5[%c0_10, %c0_11] : memref<32x32xbf16, #tpu.memory_space<vmem>>, vector<32x32xbf16>
    %cst_12 = arith.constant dense<0.000000e+00> : vector<8x32xf32>
    %38 = tpu.matmul %36, %37, %cst_12 {dimension_numbers = #tpu.dot_dimension_numbers<[1], [0], [0], [1], [0, 0, 1, 1], [], []>} : vector<8x32xbf16>, vector<32x32xbf16>, vector<8x32xf32> -> vector<8x32xf32>
    %c0_13 = arith.constant 0 : index
    %c0_14 = arith.constant 0 : index
    %39 = vector.load %arg6[%c0_13, %c0_14] : memref<1x32xf32, #tpu.memory_space<vmem>>, vector<1x32xf32>
    %40 = vector.shape_cast %39 : vector<1x32xf32> to vector<32xf32>
    %41 = vector.shape_cast %40 : vector<32xf32> to vector<1x32xf32>
    %42 = vector.broadcast %41 : vector<1x32xf32> to vector<8x32xf32>
    %43 = arith.addf %38, %42 : vector<8x32xf32>
    %cst_15 = arith.constant 0.353553385 : f32
    %44 = vector.broadcast %cst_15 : f32 to vector<8x32xf32>
    %45 = arith.mulf %43, %44 : vector<8x32xf32>
    %46 = tpu.iota {dimensions = array<i32: 0>} : vector<8x8xi32>
    %47 = tpu.iota {dimensions = array<i32: 1>} : vector<8x8xi32>
    %48 = arith.cmpi sge, %46, %47 : vector<8x8xi32>
    %cst_16 = arith.constant 0.000000e+00 : f32
    %49 = vector.broadcast %cst_16 : f32 to vector<8x32xf32>
    %50 = vector.extract_strided_slice %45 {offsets = [0, 0], sizes = [8, 8], strides = [1, 1]} : vector<8x32xf32> to vector<8x8xf32>
    %51 = arith.truncf %50 : vector<8x8xf32> to vector<8x8xbf16>
    %cst_17 = arith.constant -1.000000e+30 : f32
    %52 = vector.broadcast %cst_17 : f32 to vector<8x1xf32>
    %c0_18 = arith.constant 0 : index
    %c0_19 = arith.constant 0 : index
    %53 = vector.load %arg20[%c0_18, %c0_19] : memref<8x1xf32, #tpu.memory_space<vmem>>, vector<8x1xf32>
    tpu.vector_store %arg20[%c0_18, %c0_19], %52 {strides = array<i32>} : memref<8x1xf32, #tpu.memory_space<vmem>>, vector<8x1xf32>,
    %cst_20 = arith.constant 0.000000e+00 : f32
    %54 = vector.broadcast %cst_20 : f32 to vector<8x1xf32>
    %c0_21 = arith.constant 0 : index
    %c0_22 = arith.constant 0 : index
    %55 = vector.load %arg21[%c0_21, %c0_22] : memref<8x1xf32, #tpu.memory_space<vmem>>, vector<8x1xf32>
    tpu.vector_store %arg21[%c0_21, %c0_22], %54 {strides = array<i32>} : memref<8x1xf32, #tpu.memory_space<vmem>>, vector<8x1xf32>,
    %cst_23 = arith.constant 0.000000e+00 : f32
    %56 = vector.broadcast %cst_23 : f32 to vector<8x8xf32>
    %c0_24 = arith.constant 0 : index
    %c0_25 = arith.constant 0 : index
    %57 = vector.load %arg22[%c0_24, %c0_25] : memref<8x8xf32, #tpu.memory_space<vmem>>, vector<8x8xf32>
    tpu.vector_store %arg22[%c0_24, %c0_25], %56 {strides = array<i32>} : memref<8x8xf32, #tpu.memory_space<vmem>>, vector<8x8xf32>,
    %c1_i32 = arith.constant 1 : i32
    %58 = arith.addi %arg1, %c1_i32 : i32
    %c0_i32_26 = arith.constant 0 : i32
    %59 = arith.subi %58, %c0_i32_26 : i32
    %c1_i32_27 = arith.constant 1 : i32
    %c1_i32_28 = arith.constant 1 : i32
    %60 = arith.subi %c1_i32_27, %c1_i32_28 : i32
    %61 = arith.addi %59, %60 : i32
    %c1_i32_29 = arith.constant 1 : i32
    %62 = arith.divsi %61, %c1_i32_29 : i32
    %c1_i32_30 = arith.constant 1 : i32
    %c0_i32_31 = arith.constant 0 : i32
    %c0_i32_32 = arith.constant 0 : i32
    %63 = arith.subi %62, %c0_i32_32 : i32
    %64 = arith.addi %c0_i32_32, %63 : i32
    %c1_i32_33 = arith.constant 1 : i32
    scf.for %arg23 = %c0_i32_32 to %64 step %c1_i32_33  : i32 {
      %217 = arith.muli %arg23, %c1_i32_30 : i32
      %218 = arith.addi %c0_i32_31, %217 : i32
      %c8_i32_145 = arith.constant 8 : i32
      %219 = arith.muli %218, %c8_i32_145 : i32
      %220 = tpu.assume_multiple %219, 8 : i32
      %c0_146 = arith.constant 0 : index
      %221 = arith.index_cast %220 : i32 to index
      %c0_147 = arith.constant 0 : index
      %222 = vector.load %arg18[%c0_146, %221, %c0_147] : memref<4x8x8xbf16, #tpu.memory_space<vmem>>, vector<1x8x8xbf16>
      %223 = vector.shape_cast %222 : vector<1x8x8xbf16> to vector<8x8xbf16>
      %c0_148 = arith.constant 0 : index
      %224 = arith.index_cast %220 : i32 to index
      %c0_149 = arith.constant 0 : index
      %225 = vector.load %arg19[%c0_148, %224, %c0_149] : memref<4x8x8xbf16, #tpu.memory_space<vmem>>, vector<1x8x8xbf16>
      %226 = vector.shape_cast %225 : vector<1x8x8xbf16> to vector<8x8xbf16>
      %cst_150 = arith.constant dense<0.000000e+00> : vector<8x8xf32>
      %227 = tpu.matmul %51, %223, %cst_150 {dimension_numbers = #tpu.dot_dimension_numbers<[1], [1], [0], [0], [0, 0, 1, 0], [], []>} : vector<8x8xbf16>, vector<8x8xbf16>, vector<8x8xf32> -> vector<8x8xf32>
      %228 = arith.cmpi slt, %218, %arg1 : i32
      %229 = vector.broadcast %228 : i1 to vector<8x8xi1>
      %230 = arith.ori %229, %48 : vector<8x8xi1>
      %cst_151 = arith.constant -1.000000e+30 : f32
      %231 = vector.broadcast %cst_151 : f32 to vector<8x8xf32>
      %232 = arith.select %230, %227, %231 : vector<8x8xi1>, vector<8x8xf32>
      %c0_152 = arith.constant 0 : index
      %c0_153 = arith.constant 0 : index
      %233 = vector.load %arg20[%c0_152, %c0_153] : memref<8x1xf32, #tpu.memory_space<vmem>>, vector<8x1xf32>
      %cst_154 = arith.constant dense<0xFF800000> : vector<8xf32>
      %234 = vector.multi_reduction <maximumf>, %232, %cst_154 [1] : vector<8x8xf32> to vector<8xf32>
      %235 = vector.shape_cast %234 : vector<8xf32> to vector<8x1xf32>
      %236 = arith.maximumf %233, %235 : vector<8x1xf32>
      %237 = arith.subf %233, %236 : vector<8x1xf32>
      %238 = math.exp %237 : vector<8x1xf32>
      %239 = vector.broadcast %236 : vector<8x1xf32> to vector<8x8xf32>
      %240 = arith.subf %232, %239 : vector<8x8xf32>
      %241 = math.exp %240 : vector<8x8xf32>
      %c0_155 = arith.constant 0 : index
      %c0_156 = arith.constant 0 : index
      %242 = vector.load %arg21[%c0_155, %c0_156] : memref<8x1xf32, #tpu.memory_space<vmem>>, vector<8x1xf32>
      %243 = arith.mulf %238, %242 : vector<8x1xf32>
      %cst_157 = arith.constant dense<0.000000e+00> : vector<8xf32>
      %244 = vector.multi_reduction <add>, %241, %cst_157 [1] : vector<8x8xf32> to vector<8xf32>
      %245 = vector.shape_cast %244 : vector<8xf32> to vector<8x1xf32>
      %246 = arith.addf %243, %245 : vector<8x1xf32>
      %c0_158 = arith.constant 0 : index
      %c0_159 = arith.constant 0 : index
      %247 = vector.load %arg21[%c0_158, %c0_159] : memref<8x1xf32, #tpu.memory_space<vmem>>, vector<8x1xf32>
      tpu.vector_store %arg21[%c0_158, %c0_159], %246 {strides = array<i32>} : memref<8x1xf32, #tpu.memory_space<vmem>>, vector<8x1xf32>,
      %c0_160 = arith.constant 0 : index
      %c0_161 = arith.constant 0 : index
      %248 = vector.load %arg22[%c0_160, %c0_161] : memref<8x8xf32, #tpu.memory_space<vmem>>, vector<8x8xf32>
      %249 = vector.broadcast %238 : vector<8x1xf32> to vector<8x8xf32>
      %250 = arith.mulf %249, %248 : vector<8x8xf32>
      %251 = arith.truncf %241 : vector<8x8xf32> to vector<8x8xbf16>
      %cst_162 = arith.constant dense<0.000000e+00> : vector<8x8xf32>
      %252 = tpu.matmul %251, %226, %cst_162 {dimension_numbers = #tpu.dot_dimension_numbers<[1], [0], [0], [1], [0, 0, 1, 1], [], []>} : vector<8x8xbf16>, vector<8x8xbf16>, vector<8x8xf32> -> vector<8x8xf32>
      %253 = arith.addf %250, %252 : vector<8x8xf32>
      %c0_163 = arith.constant 0 : index
      %c0_164 = arith.constant 0 : index
      %254 = vector.load %arg22[%c0_163, %c0_164] : memref<8x8xf32, #tpu.memory_space<vmem>>, vector<8x8xf32>
      tpu.vector_store %arg22[%c0_163, %c0_164], %253 {strides = array<i32>} : memref<8x8xf32, #tpu.memory_space<vmem>>, vector<8x8xf32>,
      %c0_165 = arith.constant 0 : index
      %c0_166 = arith.constant 0 : index
      %255 = vector.load %arg20[%c0_165, %c0_166] : memref<8x1xf32, #tpu.memory_space<vmem>>, vector<8x1xf32>
      tpu.vector_store %arg20[%c0_165, %c0_166], %236 {strides = array<i32>} : memref<8x1xf32, #tpu.memory_space<vmem>>, vector<8x1xf32>,
    }
    %c0_34 = arith.constant 0 : index
    %c0_35 = arith.constant 0 : index
    %65 = vector.load %arg22[%c0_34, %c0_35] : memref<8x8xf32, #tpu.memory_space<vmem>>, vector<8x8xf32>
    %c0_36 = arith.constant 0 : index
    %c0_37 = arith.constant 0 : index
    %66 = vector.load %arg21[%c0_36, %c0_37] : memref<8x1xf32, #tpu.memory_space<vmem>>, vector<8x1xf32>
    %67 = tpu.reciprocal %66 {approx = true} : vector<8x1xf32> -> vector<8x1xf32>
    %68 = vector.broadcast %67 : vector<8x1xf32> to vector<8x8xf32>
    %69 = arith.mulf %65, %68 : vector<8x8xf32>
    %70 = arith.truncf %69 : vector<8x8xf32> to vector<8x8xbf16>
    %c0_38 = arith.constant 0 : index
    %c0_39 = arith.constant 0 : index
    %c0_40 = arith.constant 0 : index
    %71 = vector.load %arg9[%c0_38, %c0_39, %c0_40] : memref<4x8x32xbf16, #tpu.memory_space<vmem>>, vector<1x8x32xbf16>
    %72 = vector.shape_cast %71 : vector<1x8x32xbf16> to vector<8x32xbf16>
    %cst_41 = arith.constant dense<0.000000e+00> : vector<8x32xf32>
    %73 = tpu.matmul %70, %72, %cst_41 {dimension_numbers = #tpu.dot_dimension_numbers<[1], [0], [0], [1], [0, 0, 1, 1], [], []>} : vector<8x8xbf16>, vector<8x32xbf16>, vector<8x32xf32> -> vector<8x32xf32>
    %74 = arith.addf %49, %73 : vector<8x32xf32>
    %75 = vector.extract_strided_slice %45 {offsets = [0, 8], sizes = [8, 8], strides = [1, 1]} : vector<8x32xf32> to vector<8x8xf32>
    %76 = arith.truncf %75 : vector<8x8xf32> to vector<8x8xbf16>
    %cst_42 = arith.constant -1.000000e+30 : f32
    %77 = vector.broadcast %cst_42 : f32 to vector<8x1xf32>
    %c0_43 = arith.constant 0 : index
    %c0_44 = arith.constant 0 : index
    %78 = vector.load %arg20[%c0_43, %c0_44] : memref<8x1xf32, #tpu.memory_space<vmem>>, vector<8x1xf32>
    tpu.vector_store %arg20[%c0_43, %c0_44], %77 {strides = array<i32>} : memref<8x1xf32, #tpu.memory_space<vmem>>, vector<8x1xf32>,
    %cst_45 = arith.constant 0.000000e+00 : f32
    %79 = vector.broadcast %cst_45 : f32 to vector<8x1xf32>
    %c0_46 = arith.constant 0 : index
    %c0_47 = arith.constant 0 : index
    %80 = vector.load %arg21[%c0_46, %c0_47] : memref<8x1xf32, #tpu.memory_space<vmem>>, vector<8x1xf32>
    tpu.vector_store %arg21[%c0_46, %c0_47], %79 {strides = array<i32>} : memref<8x1xf32, #tpu.memory_space<vmem>>, vector<8x1xf32>,
    %cst_48 = arith.constant 0.000000e+00 : f32
    %81 = vector.broadcast %cst_48 : f32 to vector<8x8xf32>
    %c0_49 = arith.constant 0 : index
    %c0_50 = arith.constant 0 : index
    %82 = vector.load %arg22[%c0_49, %c0_50] : memref<8x8xf32, #tpu.memory_space<vmem>>, vector<8x8xf32>
    tpu.vector_store %arg22[%c0_49, %c0_50], %81 {strides = array<i32>} : memref<8x8xf32, #tpu.memory_space<vmem>>, vector<8x8xf32>,
    %c1_i32_51 = arith.constant 1 : i32
    %83 = arith.addi %arg1, %c1_i32_51 : i32
    %c0_i32_52 = arith.constant 0 : i32
    %84 = arith.subi %83, %c0_i32_52 : i32
    %c1_i32_53 = arith.constant 1 : i32
    %c1_i32_54 = arith.constant 1 : i32
    %85 = arith.subi %c1_i32_53, %c1_i32_54 : i32
    %86 = arith.addi %84, %85 : i32
    %c1_i32_55 = arith.constant 1 : i32
    %87 = arith.divsi %86, %c1_i32_55 : i32
    %c1_i32_56 = arith.constant 1 : i32
    %c0_i32_57 = arith.constant 0 : i32
    %c0_i32_58 = arith.constant 0 : i32
    %88 = arith.subi %87, %c0_i32_58 : i32
    %89 = arith.addi %c0_i32_58, %88 : i32
    %c1_i32_59 = arith.constant 1 : i32
    scf.for %arg23 = %c0_i32_58 to %89 step %c1_i32_59  : i32 {
      %217 = arith.muli %arg23, %c1_i32_56 : i32
      %218 = arith.addi %c0_i32_57, %217 : i32
      %c8_i32_145 = arith.constant 8 : i32
      %219 = arith.muli %218, %c8_i32_145 : i32
      %220 = tpu.assume_multiple %219, 8 : i32
      %c1_146 = arith.constant 1 : index
      %221 = arith.index_cast %220 : i32 to index
      %c0_147 = arith.constant 0 : index
      %222 = vector.load %arg18[%c1_146, %221, %c0_147] : memref<4x8x8xbf16, #tpu.memory_space<vmem>>, vector<1x8x8xbf16>
      %223 = vector.shape_cast %222 : vector<1x8x8xbf16> to vector<8x8xbf16>
      %c1_148 = arith.constant 1 : index
      %224 = arith.index_cast %220 : i32 to index
      %c0_149 = arith.constant 0 : index
      %225 = vector.load %arg19[%c1_148, %224, %c0_149] : memref<4x8x8xbf16, #tpu.memory_space<vmem>>, vector<1x8x8xbf16>
      %226 = vector.shape_cast %225 : vector<1x8x8xbf16> to vector<8x8xbf16>
      %cst_150 = arith.constant dense<0.000000e+00> : vector<8x8xf32>
      %227 = tpu.matmul %76, %223, %cst_150 {dimension_numbers = #tpu.dot_dimension_numbers<[1], [1], [0], [0], [0, 0, 1, 0], [], []>} : vector<8x8xbf16>, vector<8x8xbf16>, vector<8x8xf32> -> vector<8x8xf32>
      %228 = arith.cmpi slt, %218, %arg1 : i32
      %229 = vector.broadcast %228 : i1 to vector<8x8xi1>
      %230 = arith.ori %229, %48 : vector<8x8xi1>
      %cst_151 = arith.constant -1.000000e+30 : f32
      %231 = vector.broadcast %cst_151 : f32 to vector<8x8xf32>
      %232 = arith.select %230, %227, %231 : vector<8x8xi1>, vector<8x8xf32>
      %c0_152 = arith.constant 0 : index
      %c0_153 = arith.constant 0 : index
      %233 = vector.load %arg20[%c0_152, %c0_153] : memref<8x1xf32, #tpu.memory_space<vmem>>, vector<8x1xf32>
      %cst_154 = arith.constant dense<0xFF800000> : vector<8xf32>
      %234 = vector.multi_reduction <maximumf>, %232, %cst_154 [1] : vector<8x8xf32> to vector<8xf32>
      %235 = vector.shape_cast %234 : vector<8xf32> to vector<8x1xf32>
      %236 = arith.maximumf %233, %235 : vector<8x1xf32>
      %237 = arith.subf %233, %236 : vector<8x1xf32>
      %238 = math.exp %237 : vector<8x1xf32>
      %239 = vector.broadcast %236 : vector<8x1xf32> to vector<8x8xf32>
      %240 = arith.subf %232, %239 : vector<8x8xf32>
      %241 = math.exp %240 : vector<8x8xf32>
      %c0_155 = arith.constant 0 : index
      %c0_156 = arith.constant 0 : index
      %242 = vector.load %arg21[%c0_155, %c0_156] : memref<8x1xf32, #tpu.memory_space<vmem>>, vector<8x1xf32>
      %243 = arith.mulf %238, %242 : vector<8x1xf32>
      %cst_157 = arith.constant dense<0.000000e+00> : vector<8xf32>
      %244 = vector.multi_reduction <add>, %241, %cst_157 [1] : vector<8x8xf32> to vector<8xf32>
      %245 = vector.shape_cast %244 : vector<8xf32> to vector<8x1xf32>
      %246 = arith.addf %243, %245 : vector<8x1xf32>
      %c0_158 = arith.constant 0 : index
      %c0_159 = arith.constant 0 : index
      %247 = vector.load %arg21[%c0_158, %c0_159] : memref<8x1xf32, #tpu.memory_space<vmem>>, vector<8x1xf32>
      tpu.vector_store %arg21[%c0_158, %c0_159], %246 {strides = array<i32>} : memref<8x1xf32, #tpu.memory_space<vmem>>, vector<8x1xf32>,
      %c0_160 = arith.constant 0 : index
      %c0_161 = arith.constant 0 : index
      %248 = vector.load %arg22[%c0_160, %c0_161] : memref<8x8xf32, #tpu.memory_space<vmem>>, vector<8x8xf32>
      %249 = vector.broadcast %238 : vector<8x1xf32> to vector<8x8xf32>
      %250 = arith.mulf %249, %248 : vector<8x8xf32>
      %251 = arith.truncf %241 : vector<8x8xf32> to vector<8x8xbf16>
      %cst_162 = arith.constant dense<0.000000e+00> : vector<8x8xf32>
      %252 = tpu.matmul %251, %226, %cst_162 {dimension_numbers = #tpu.dot_dimension_numbers<[1], [0], [0], [1], [0, 0, 1, 1], [], []>} : vector<8x8xbf16>, vector<8x8xbf16>, vector<8x8xf32> -> vector<8x8xf32>
      %253 = arith.addf %250, %252 : vector<8x8xf32>
      %c0_163 = arith.constant 0 : index
      %c0_164 = arith.constant 0 : index
      %254 = vector.load %arg22[%c0_163, %c0_164] : memref<8x8xf32, #tpu.memory_space<vmem>>, vector<8x8xf32>
      tpu.vector_store %arg22[%c0_163, %c0_164], %253 {strides = array<i32>} : memref<8x8xf32, #tpu.memory_space<vmem>>, vector<8x8xf32>,
      %c0_165 = arith.constant 0 : index
      %c0_166 = arith.constant 0 : index
      %255 = vector.load %arg20[%c0_165, %c0_166] : memref<8x1xf32, #tpu.memory_space<vmem>>, vector<8x1xf32>
      tpu.vector_store %arg20[%c0_165, %c0_166], %236 {strides = array<i32>} : memref<8x1xf32, #tpu.memory_space<vmem>>, vector<8x1xf32>,
    }
    %c0_60 = arith.constant 0 : index
    %c0_61 = arith.constant 0 : index
    %90 = vector.load %arg22[%c0_60, %c0_61] : memref<8x8xf32, #tpu.memory_space<vmem>>, vector<8x8xf32>
    %c0_62 = arith.constant 0 : index
    %c0_63 = arith.constant 0 : index
    %91 = vector.load %arg21[%c0_62, %c0_63] : memref<8x1xf32, #tpu.memory_space<vmem>>, vector<8x1xf32>
    %92 = tpu.reciprocal %91 {approx = true} : vector<8x1xf32> -> vector<8x1xf32>
    %93 = vector.broadcast %92 : vector<8x1xf32> to vector<8x8xf32>
    %94 = arith.mulf %90, %93 : vector<8x8xf32>
    %95 = arith.truncf %94 : vector<8x8xf32> to vector<8x8xbf16>
    %c1 = arith.constant 1 : index
    %c0_64 = arith.constant 0 : index
    %c0_65 = arith.constant 0 : index
    %96 = vector.load %arg9[%c1, %c0_64, %c0_65] : memref<4x8x32xbf16, #tpu.memory_space<vmem>>, vector<1x8x32xbf16>
    %97 = vector.shape_cast %96 : vector<1x8x32xbf16> to vector<8x32xbf16>
    %cst_66 = arith.constant dense<0.000000e+00> : vector<8x32xf32>
    %98 = tpu.matmul %95, %97, %cst_66 {dimension_numbers = #tpu.dot_dimension_numbers<[1], [0], [0], [1], [0, 0, 1, 1], [], []>} : vector<8x8xbf16>, vector<8x32xbf16>, vector<8x32xf32> -> vector<8x32xf32>
    %99 = arith.addf %74, %98 : vector<8x32xf32>
    %100 = vector.extract_strided_slice %45 {offsets = [0, 16], sizes = [8, 8], strides = [1, 1]} : vector<8x32xf32> to vector<8x8xf32>
    %101 = arith.truncf %100 : vector<8x8xf32> to vector<8x8xbf16>
    %cst_67 = arith.constant -1.000000e+30 : f32
    %102 = vector.broadcast %cst_67 : f32 to vector<8x1xf32>
    %c0_68 = arith.constant 0 : index
    %c0_69 = arith.constant 0 : index
    %103 = vector.load %arg20[%c0_68, %c0_69] : memref<8x1xf32, #tpu.memory_space<vmem>>, vector<8x1xf32>
    tpu.vector_store %arg20[%c0_68, %c0_69], %102 {strides = array<i32>} : memref<8x1xf32, #tpu.memory_space<vmem>>, vector<8x1xf32>,
    %cst_70 = arith.constant 0.000000e+00 : f32
    %104 = vector.broadcast %cst_70 : f32 to vector<8x1xf32>
    %c0_71 = arith.constant 0 : index
    %c0_72 = arith.constant 0 : index
    %105 = vector.load %arg21[%c0_71, %c0_72] : memref<8x1xf32, #tpu.memory_space<vmem>>, vector<8x1xf32>
    tpu.vector_store %arg21[%c0_71, %c0_72], %104 {strides = array<i32>} : memref<8x1xf32, #tpu.memory_space<vmem>>, vector<8x1xf32>,
    %cst_73 = arith.constant 0.000000e+00 : f32
    %106 = vector.broadcast %cst_73 : f32 to vector<8x8xf32>
    %c0_74 = arith.constant 0 : index
    %c0_75 = arith.constant 0 : index
    %107 = vector.load %arg22[%c0_74, %c0_75] : memref<8x8xf32, #tpu.memory_space<vmem>>, vector<8x8xf32>
    tpu.vector_store %arg22[%c0_74, %c0_75], %106 {strides = array<i32>} : memref<8x8xf32, #tpu.memory_space<vmem>>, vector<8x8xf32>,
    %c1_i32_76 = arith.constant 1 : i32
    %108 = arith.addi %arg1, %c1_i32_76 : i32
    %c0_i32_77 = arith.constant 0 : i32
    %109 = arith.subi %108, %c0_i32_77 : i32
    %c1_i32_78 = arith.constant 1 : i32
    %c1_i32_79 = arith.constant 1 : i32
    %110 = arith.subi %c1_i32_78, %c1_i32_79 : i32
    %111 = arith.addi %109, %110 : i32
    %c1_i32_80 = arith.constant 1 : i32
    %112 = arith.divsi %111, %c1_i32_80 : i32
    %c1_i32_81 = arith.constant 1 : i32
    %c0_i32_82 = arith.constant 0 : i32
    %c0_i32_83 = arith.constant 0 : i32
    %113 = arith.subi %112, %c0_i32_83 : i32
    %114 = arith.addi %c0_i32_83, %113 : i32
    %c1_i32_84 = arith.constant 1 : i32
    scf.for %arg23 = %c0_i32_83 to %114 step %c1_i32_84  : i32 {
      %217 = arith.muli %arg23, %c1_i32_81 : i32
      %218 = arith.addi %c0_i32_82, %217 : i32
      %c8_i32_145 = arith.constant 8 : i32
      %219 = arith.muli %218, %c8_i32_145 : i32
      %220 = tpu.assume_multiple %219, 8 : i32
      %c2_146 = arith.constant 2 : index
      %221 = arith.index_cast %220 : i32 to index
      %c0_147 = arith.constant 0 : index
      %222 = vector.load %arg18[%c2_146, %221, %c0_147] : memref<4x8x8xbf16, #tpu.memory_space<vmem>>, vector<1x8x8xbf16>
      %223 = vector.shape_cast %222 : vector<1x8x8xbf16> to vector<8x8xbf16>
      %c2_148 = arith.constant 2 : index
      %224 = arith.index_cast %220 : i32 to index
      %c0_149 = arith.constant 0 : index
      %225 = vector.load %arg19[%c2_148, %224, %c0_149] : memref<4x8x8xbf16, #tpu.memory_space<vmem>>, vector<1x8x8xbf16>
      %226 = vector.shape_cast %225 : vector<1x8x8xbf16> to vector<8x8xbf16>
      %cst_150 = arith.constant dense<0.000000e+00> : vector<8x8xf32>
      %227 = tpu.matmul %101, %223, %cst_150 {dimension_numbers = #tpu.dot_dimension_numbers<[1], [1], [0], [0], [0, 0, 1, 0], [], []>} : vector<8x8xbf16>, vector<8x8xbf16>, vector<8x8xf32> -> vector<8x8xf32>
      %228 = arith.cmpi slt, %218, %arg1 : i32
      %229 = vector.broadcast %228 : i1 to vector<8x8xi1>
      %230 = arith.ori %229, %48 : vector<8x8xi1>
      %cst_151 = arith.constant -1.000000e+30 : f32
      %231 = vector.broadcast %cst_151 : f32 to vector<8x8xf32>
      %232 = arith.select %230, %227, %231 : vector<8x8xi1>, vector<8x8xf32>
      %c0_152 = arith.constant 0 : index
      %c0_153 = arith.constant 0 : index
      %233 = vector.load %arg20[%c0_152, %c0_153] : memref<8x1xf32, #tpu.memory_space<vmem>>, vector<8x1xf32>
      %cst_154 = arith.constant dense<0xFF800000> : vector<8xf32>
      %234 = vector.multi_reduction <maximumf>, %232, %cst_154 [1] : vector<8x8xf32> to vector<8xf32>
      %235 = vector.shape_cast %234 : vector<8xf32> to vector<8x1xf32>
      %236 = arith.maximumf %233, %235 : vector<8x1xf32>
      %237 = arith.subf %233, %236 : vector<8x1xf32>
      %238 = math.exp %237 : vector<8x1xf32>
      %239 = vector.broadcast %236 : vector<8x1xf32> to vector<8x8xf32>
      %240 = arith.subf %232, %239 : vector<8x8xf32>
      %241 = math.exp %240 : vector<8x8xf32>
      %c0_155 = arith.constant 0 : index
      %c0_156 = arith.constant 0 : index
      %242 = vector.load %arg21[%c0_155, %c0_156] : memref<8x1xf32, #tpu.memory_space<vmem>>, vector<8x1xf32>
      %243 = arith.mulf %238, %242 : vector<8x1xf32>
      %cst_157 = arith.constant dense<0.000000e+00> : vector<8xf32>
      %244 = vector.multi_reduction <add>, %241, %cst_157 [1] : vector<8x8xf32> to vector<8xf32>
      %245 = vector.shape_cast %244 : vector<8xf32> to vector<8x1xf32>
      %246 = arith.addf %243, %245 : vector<8x1xf32>
      %c0_158 = arith.constant 0 : index
      %c0_159 = arith.constant 0 : index
      %247 = vector.load %arg21[%c0_158, %c0_159] : memref<8x1xf32, #tpu.memory_space<vmem>>, vector<8x1xf32>
      tpu.vector_store %arg21[%c0_158, %c0_159], %246 {strides = array<i32>} : memref<8x1xf32, #tpu.memory_space<vmem>>, vector<8x1xf32>,
      %c0_160 = arith.constant 0 : index
      %c0_161 = arith.constant 0 : index
      %248 = vector.load %arg22[%c0_160, %c0_161] : memref<8x8xf32, #tpu.memory_space<vmem>>, vector<8x8xf32>
      %249 = vector.broadcast %238 : vector<8x1xf32> to vector<8x8xf32>
      %250 = arith.mulf %249, %248 : vector<8x8xf32>
      %251 = arith.truncf %241 : vector<8x8xf32> to vector<8x8xbf16>
      %cst_162 = arith.constant dense<0.000000e+00> : vector<8x8xf32>
      %252 = tpu.matmul %251, %226, %cst_162 {dimension_numbers = #tpu.dot_dimension_numbers<[1], [0], [0], [1], [0, 0, 1, 1], [], []>} : vector<8x8xbf16>, vector<8x8xbf16>, vector<8x8xf32> -> vector<8x8xf32>
      %253 = arith.addf %250, %252 : vector<8x8xf32>
      %c0_163 = arith.constant 0 : index
      %c0_164 = arith.constant 0 : index
      %254 = vector.load %arg22[%c0_163, %c0_164] : memref<8x8xf32, #tpu.memory_space<vmem>>, vector<8x8xf32>
      tpu.vector_store %arg22[%c0_163, %c0_164], %253 {strides = array<i32>} : memref<8x8xf32, #tpu.memory_space<vmem>>, vector<8x8xf32>,
      %c0_165 = arith.constant 0 : index
      %c0_166 = arith.constant 0 : index
      %255 = vector.load %arg20[%c0_165, %c0_166] : memref<8x1xf32, #tpu.memory_space<vmem>>, vector<8x1xf32>
      tpu.vector_store %arg20[%c0_165, %c0_166], %236 {strides = array<i32>} : memref<8x1xf32, #tpu.memory_space<vmem>>, vector<8x1xf32>,
    }
    %c0_85 = arith.constant 0 : index
    %c0_86 = arith.constant 0 : index
    %115 = vector.load %arg22[%c0_85, %c0_86] : memref<8x8xf32, #tpu.memory_space<vmem>>, vector<8x8xf32>
    %c0_87 = arith.constant 0 : index
    %c0_88 = arith.constant 0 : index
    %116 = vector.load %arg21[%c0_87, %c0_88] : memref<8x1xf32, #tpu.memory_space<vmem>>, vector<8x1xf32>
    %117 = tpu.reciprocal %116 {approx = true} : vector<8x1xf32> -> vector<8x1xf32>
    %118 = vector.broadcast %117 : vector<8x1xf32> to vector<8x8xf32>
    %119 = arith.mulf %115, %118 : vector<8x8xf32>
    %120 = arith.truncf %119 : vector<8x8xf32> to vector<8x8xbf16>
    %c2 = arith.constant 2 : index
    %c0_89 = arith.constant 0 : index
    %c0_90 = arith.constant 0 : index
    %121 = vector.load %arg9[%c2, %c0_89, %c0_90] : memref<4x8x32xbf16, #tpu.memory_space<vmem>>, vector<1x8x32xbf16>
    %122 = vector.shape_cast %121 : vector<1x8x32xbf16> to vector<8x32xbf16>
    %cst_91 = arith.constant dense<0.000000e+00> : vector<8x32xf32>
    %123 = tpu.matmul %120, %122, %cst_91 {dimension_numbers = #tpu.dot_dimension_numbers<[1], [0], [0], [1], [0, 0, 1, 1], [], []>} : vector<8x8xbf16>, vector<8x32xbf16>, vector<8x32xf32> -> vector<8x32xf32>
    %124 = arith.addf %99, %123 : vector<8x32xf32>
    %125 = vector.extract_strided_slice %45 {offsets = [0, 24], sizes = [8, 8], strides = [1, 1]} : vector<8x32xf32> to vector<8x8xf32>
    %126 = arith.truncf %125 : vector<8x8xf32> to vector<8x8xbf16>
    %cst_92 = arith.constant -1.000000e+30 : f32
    %127 = vector.broadcast %cst_92 : f32 to vector<8x1xf32>
    %c0_93 = arith.constant 0 : index
    %c0_94 = arith.constant 0 : index
    %128 = vector.load %arg20[%c0_93, %c0_94] : memref<8x1xf32, #tpu.memory_space<vmem>>, vector<8x1xf32>
    tpu.vector_store %arg20[%c0_93, %c0_94], %127 {strides = array<i32>} : memref<8x1xf32, #tpu.memory_space<vmem>>, vector<8x1xf32>,
    %cst_95 = arith.constant 0.000000e+00 : f32
    %129 = vector.broadcast %cst_95 : f32 to vector<8x1xf32>
    %c0_96 = arith.constant 0 : index
    %c0_97 = arith.constant 0 : index
    %130 = vector.load %arg21[%c0_96, %c0_97] : memref<8x1xf32, #tpu.memory_space<vmem>>, vector<8x1xf32>
    tpu.vector_store %arg21[%c0_96, %c0_97], %129 {strides = array<i32>} : memref<8x1xf32, #tpu.memory_space<vmem>>, vector<8x1xf32>,
    %cst_98 = arith.constant 0.000000e+00 : f32
    %131 = vector.broadcast %cst_98 : f32 to vector<8x8xf32>
    %c0_99 = arith.constant 0 : index
    %c0_100 = arith.constant 0 : index
    %132 = vector.load %arg22[%c0_99, %c0_100] : memref<8x8xf32, #tpu.memory_space<vmem>>, vector<8x8xf32>
    tpu.vector_store %arg22[%c0_99, %c0_100], %131 {strides = array<i32>} : memref<8x8xf32, #tpu.memory_space<vmem>>, vector<8x8xf32>,
    %c1_i32_101 = arith.constant 1 : i32
    %133 = arith.addi %arg1, %c1_i32_101 : i32
    %c0_i32_102 = arith.constant 0 : i32
    %134 = arith.subi %133, %c0_i32_102 : i32
    %c1_i32_103 = arith.constant 1 : i32
    %c1_i32_104 = arith.constant 1 : i32
    %135 = arith.subi %c1_i32_103, %c1_i32_104 : i32
    %136 = arith.addi %134, %135 : i32
    %c1_i32_105 = arith.constant 1 : i32
    %137 = arith.divsi %136, %c1_i32_105 : i32
    %c1_i32_106 = arith.constant 1 : i32
    %c0_i32_107 = arith.constant 0 : i32
    %c0_i32_108 = arith.constant 0 : i32
    %138 = arith.subi %137, %c0_i32_108 : i32
    %139 = arith.addi %c0_i32_108, %138 : i32
    %c1_i32_109 = arith.constant 1 : i32
    scf.for %arg23 = %c0_i32_108 to %139 step %c1_i32_109  : i32 {
      %217 = arith.muli %arg23, %c1_i32_106 : i32
      %218 = arith.addi %c0_i32_107, %217 : i32
      %c8_i32_145 = arith.constant 8 : i32
      %219 = arith.muli %218, %c8_i32_145 : i32
      %220 = tpu.assume_multiple %219, 8 : i32
      %c3_146 = arith.constant 3 : index
      %221 = arith.index_cast %220 : i32 to index
      %c0_147 = arith.constant 0 : index
      %222 = vector.load %arg18[%c3_146, %221, %c0_147] : memref<4x8x8xbf16, #tpu.memory_space<vmem>>, vector<1x8x8xbf16>
      %223 = vector.shape_cast %222 : vector<1x8x8xbf16> to vector<8x8xbf16>
      %c3_148 = arith.constant 3 : index
      %224 = arith.index_cast %220 : i32 to index
      %c0_149 = arith.constant 0 : index
      %225 = vector.load %arg19[%c3_148, %224, %c0_149] : memref<4x8x8xbf16, #tpu.memory_space<vmem>>, vector<1x8x8xbf16>
      %226 = vector.shape_cast %225 : vector<1x8x8xbf16> to vector<8x8xbf16>
      %cst_150 = arith.constant dense<0.000000e+00> : vector<8x8xf32>
      %227 = tpu.matmul %126, %223, %cst_150 {dimension_numbers = #tpu.dot_dimension_numbers<[1], [1], [0], [0], [0, 0, 1, 0], [], []>} : vector<8x8xbf16>, vector<8x8xbf16>, vector<8x8xf32> -> vector<8x8xf32>
      %228 = arith.cmpi slt, %218, %arg1 : i32
      %229 = vector.broadcast %228 : i1 to vector<8x8xi1>
      %230 = arith.ori %229, %48 : vector<8x8xi1>
      %cst_151 = arith.constant -1.000000e+30 : f32
      %231 = vector.broadcast %cst_151 : f32 to vector<8x8xf32>
      %232 = arith.select %230, %227, %231 : vector<8x8xi1>, vector<8x8xf32>
      %c0_152 = arith.constant 0 : index
      %c0_153 = arith.constant 0 : index
      %233 = vector.load %arg20[%c0_152, %c0_153] : memref<8x1xf32, #tpu.memory_space<vmem>>, vector<8x1xf32>
      %cst_154 = arith.constant dense<0xFF800000> : vector<8xf32>
      %234 = vector.multi_reduction <maximumf>, %232, %cst_154 [1] : vector<8x8xf32> to vector<8xf32>
      %235 = vector.shape_cast %234 : vector<8xf32> to vector<8x1xf32>
      %236 = arith.maximumf %233, %235 : vector<8x1xf32>
      %237 = arith.subf %233, %236 : vector<8x1xf32>
      %238 = math.exp %237 : vector<8x1xf32>
      %239 = vector.broadcast %236 : vector<8x1xf32> to vector<8x8xf32>
      %240 = arith.subf %232, %239 : vector<8x8xf32>
      %241 = math.exp %240 : vector<8x8xf32>
      %c0_155 = arith.constant 0 : index
      %c0_156 = arith.constant 0 : index
      %242 = vector.load %arg21[%c0_155, %c0_156] : memref<8x1xf32, #tpu.memory_space<vmem>>, vector<8x1xf32>
      %243 = arith.mulf %238, %242 : vector<8x1xf32>
      %cst_157 = arith.constant dense<0.000000e+00> : vector<8xf32>
      %244 = vector.multi_reduction <add>, %241, %cst_157 [1] : vector<8x8xf32> to vector<8xf32>
      %245 = vector.shape_cast %244 : vector<8xf32> to vector<8x1xf32>
      %246 = arith.addf %243, %245 : vector<8x1xf32>
      %c0_158 = arith.constant 0 : index
      %c0_159 = arith.constant 0 : index
      %247 = vector.load %arg21[%c0_158, %c0_159] : memref<8x1xf32, #tpu.memory_space<vmem>>, vector<8x1xf32>
      tpu.vector_store %arg21[%c0_158, %c0_159], %246 {strides = array<i32>} : memref<8x1xf32, #tpu.memory_space<vmem>>, vector<8x1xf32>,
      %c0_160 = arith.constant 0 : index
      %c0_161 = arith.constant 0 : index
      %248 = vector.load %arg22[%c0_160, %c0_161] : memref<8x8xf32, #tpu.memory_space<vmem>>, vector<8x8xf32>
      %249 = vector.broadcast %238 : vector<8x1xf32> to vector<8x8xf32>
      %250 = arith.mulf %249, %248 : vector<8x8xf32>
      %251 = arith.truncf %241 : vector<8x8xf32> to vector<8x8xbf16>
      %cst_162 = arith.constant dense<0.000000e+00> : vector<8x8xf32>
      %252 = tpu.matmul %251, %226, %cst_162 {dimension_numbers = #tpu.dot_dimension_numbers<[1], [0], [0], [1], [0, 0, 1, 1], [], []>} : vector<8x8xbf16>, vector<8x8xbf16>, vector<8x8xf32> -> vector<8x8xf32>
      %253 = arith.addf %250, %252 : vector<8x8xf32>
      %c0_163 = arith.constant 0 : index
      %c0_164 = arith.constant 0 : index
      %254 = vector.load %arg22[%c0_163, %c0_164] : memref<8x8xf32, #tpu.memory_space<vmem>>, vector<8x8xf32>
      tpu.vector_store %arg22[%c0_163, %c0_164], %253 {strides = array<i32>} : memref<8x8xf32, #tpu.memory_space<vmem>>, vector<8x8xf32>,
      %c0_165 = arith.constant 0 : index
      %c0_166 = arith.constant 0 : index
      %255 = vector.load %arg20[%c0_165, %c0_166] : memref<8x1xf32, #tpu.memory_space<vmem>>, vector<8x1xf32>
      tpu.vector_store %arg20[%c0_165, %c0_166], %236 {strides = array<i32>} : memref<8x1xf32, #tpu.memory_space<vmem>>, vector<8x1xf32>,
    }
    %c0_110 = arith.constant 0 : index
    %c0_111 = arith.constant 0 : index
    %140 = vector.load %arg22[%c0_110, %c0_111] : memref<8x8xf32, #tpu.memory_space<vmem>>, vector<8x8xf32>
    %c0_112 = arith.constant 0 : index
    %c0_113 = arith.constant 0 : index
    %141 = vector.load %arg21[%c0_112, %c0_113] : memref<8x1xf32, #tpu.memory_space<vmem>>, vector<8x1xf32>
    %142 = tpu.reciprocal %141 {approx = true} : vector<8x1xf32> -> vector<8x1xf32>
    %143 = vector.broadcast %142 : vector<8x1xf32> to vector<8x8xf32>
    %144 = arith.mulf %140, %143 : vector<8x8xf32>
    %145 = arith.truncf %144 : vector<8x8xf32> to vector<8x8xbf16>
    %c3 = arith.constant 3 : index
    %c0_114 = arith.constant 0 : index
    %c0_115 = arith.constant 0 : index
    %146 = vector.load %arg9[%c3, %c0_114, %c0_115] : memref<4x8x32xbf16, #tpu.memory_space<vmem>>, vector<1x8x32xbf16>
    %147 = vector.shape_cast %146 : vector<1x8x32xbf16> to vector<8x32xbf16>
    %cst_116 = arith.constant dense<0.000000e+00> : vector<8x32xf32>
    %148 = tpu.matmul %145, %147, %cst_116 {dimension_numbers = #tpu.dot_dimension_numbers<[1], [0], [0], [1], [0, 0, 1, 1], [], []>} : vector<8x8xbf16>, vector<8x32xbf16>, vector<8x32xf32> -> vector<8x32xf32>
    %149 = arith.addf %124, %148 : vector<8x32xf32>
    %150 = arith.addf %11, %149 : vector<8x32xf32>
    %c0_117 = arith.constant 0 : index
    %c0_118 = arith.constant 0 : index
    %151 = vector.load %arg10[%c0_117, %c0_118] : memref<1x32xf32, #tpu.memory_space<vmem>>, vector<1x32xf32>
    %152 = vector.shape_cast %151 : vector<1x32xf32> to vector<32xf32>
    %153 = vector.shape_cast %152 : vector<32xf32> to vector<1x32xf32>
    %154 = vector.broadcast %153 : vector<1x32xf32> to vector<8x32xf32>
    %155 = arith.addf %150, %154 : vector<8x32xf32>
    %c0_119 = arith.constant 0 : index
    %c0_120 = arith.constant 0 : index
    %156 = vector.load %arg11[%c0_119, %c0_120] : memref<1x32xf32, #tpu.memory_space<vmem>>, vector<1x32xf32>
    %157 = vector.shape_cast %156 : vector<1x32xf32> to vector<32xf32>
    %c0_121 = arith.constant 0 : index
    %c0_122 = arith.constant 0 : index
    %158 = vector.load %arg12[%c0_121, %c0_122] : memref<1x32xf32, #tpu.memory_space<vmem>>, vector<1x32xf32>
    %159 = vector.shape_cast %158 : vector<1x32xf32> to vector<32xf32>
    %cst_123 = arith.constant dense<0.000000e+00> : vector<8xf32>
    %160 = vector.multi_reduction <add>, %155, %cst_123 [1] : vector<8x32xf32> to vector<8xf32>
    %161 = vector.shape_cast %160 : vector<8xf32> to vector<8x1xf32>
    %cst_124 = arith.constant 3.200000e+01 : f32
    %162 = vector.broadcast %cst_124 : f32 to vector<8x1xf32>
    %163 = arith.divf %161, %162 : vector<8x1xf32>
    %164 = vector.broadcast %163 : vector<8x1xf32> to vector<8x32xf32>
    %165 = arith.subf %155, %164 : vector<8x32xf32>
    %166 = arith.mulf %165, %165 : vector<8x32xf32>
    %cst_125 = arith.constant dense<0.000000e+00> : vector<8xf32>
    %167 = vector.multi_reduction <add>, %166, %cst_125 [1] : vector<8x32xf32> to vector<8xf32>
    %168 = vector.shape_cast %167 : vector<8xf32> to vector<8x1xf32>
    %cst_126 = arith.constant 3.200000e+01 : f32
    %169 = vector.broadcast %cst_126 : f32 to vector<8x1xf32>
    %170 = arith.divf %168, %169 : vector<8x1xf32>
    %171 = vector.broadcast %163 : vector<8x1xf32> to vector<8x32xf32>
    %172 = arith.subf %155, %171 : vector<8x32xf32>
    %cst_127 = arith.constant 9.99999974E-6 : f32
    %173 = vector.broadcast %cst_127 : f32 to vector<8x1xf32>
    %174 = arith.addf %170, %173 : vector<8x1xf32>
    %175 = math.rsqrt %174 : vector<8x1xf32>
    %176 = vector.broadcast %175 : vector<8x1xf32> to vector<8x32xf32>
    %177 = arith.mulf %172, %176 : vector<8x32xf32>
    %178 = vector.shape_cast %157 : vector<32xf32> to vector<1x32xf32>
    %179 = vector.broadcast %178 : vector<1x32xf32> to vector<8x32xf32>
    %180 = arith.mulf %177, %179 : vector<8x32xf32>
    %181 = vector.shape_cast %159 : vector<32xf32> to vector<1x32xf32>
    %182 = vector.broadcast %181 : vector<1x32xf32> to vector<8x32xf32>
    %183 = arith.addf %180, %182 : vector<8x32xf32>
    %184 = arith.truncf %183 : vector<8x32xf32> to vector<8x32xbf16>
    %c0_128 = arith.constant 0 : index
    %c0_129 = arith.constant 0 : index
    %185 = vector.load %arg13[%c0_128, %c0_129] : memref<32x128xbf16, #tpu.memory_space<vmem>>, vector<32x128xbf16>
    %cst_130 = arith.constant dense<0.000000e+00> : vector<8x128xf32>
    %186 = tpu.matmul %184, %185, %cst_130 {dimension_numbers = #tpu.dot_dimension_numbers<[1], [0], [0], [1], [0, 0, 1, 1], [], []>} : vector<8x32xbf16>, vector<32x128xbf16>, vector<8x128xf32> -> vector<8x128xf32>
    %c0_131 = arith.constant 0 : index
    %c0_132 = arith.constant 0 : index
    %187 = vector.load %arg14[%c0_131, %c0_132] : memref<1x128xf32, #tpu.memory_space<vmem>>, vector<1x128xf32>
    %188 = vector.shape_cast %187 : vector<1x128xf32> to vector<128xf32>
    %189 = vector.shape_cast %188 : vector<128xf32> to vector<1x128xf32>
    %190 = vector.broadcast %189 : vector<1x128xf32> to vector<8x128xf32>
    %191 = arith.addf %186, %190 : vector<8x128xf32>
    %cst_133 = arith.constant 5.000000e-01 : f32
    %192 = vector.broadcast %cst_133 : f32 to vector<8x128xf32>
    %193 = arith.mulf %192, %191 : vector<8x128xf32>
    %cst_134 = arith.constant 4.471500e-02 : f32
    %194 = vector.broadcast %cst_134 : f32 to vector<8x128xf32>
    %195 = arith.mulf %194, %191 : vector<8x128xf32>
    %196 = arith.mulf %195, %191 : vector<8x128xf32>
    %197 = arith.mulf %196, %191 : vector<8x128xf32>
    %198 = arith.addf %191, %197 : vector<8x128xf32>
    %cst_135 = arith.constant 0.797884583 : f32
    %199 = vector.broadcast %cst_135 : f32 to vector<8x128xf32>
    %200 = arith.mulf %199, %198 : vector<8x128xf32>
    %201 = math.tanh %200 : vector<8x128xf32>
    %cst_136 = arith.constant 1.000000e+00 : f32
    %202 = vector.broadcast %cst_136 : f32 to vector<8x128xf32>
    %203 = arith.addf %202, %201 : vector<8x128xf32>
    %204 = arith.mulf %193, %203 : vector<8x128xf32>
    %205 = arith.truncf %204 : vector<8x128xf32> to vector<8x128xbf16>
    %c0_137 = arith.constant 0 : index
    %c0_138 = arith.constant 0 : index
    %206 = vector.load %arg15[%c0_137, %c0_138] : memref<128x32xbf16, #tpu.memory_space<vmem>>, vector<128x32xbf16>
    %cst_139 = arith.constant dense<0.000000e+00> : vector<8x32xf32>
    %207 = tpu.matmul %205, %206, %cst_139 {dimension_numbers = #tpu.dot_dimension_numbers<[1], [0], [0], [1], [0, 0, 1, 1], [], []>} : vector<8x128xbf16>, vector<128x32xbf16>, vector<8x32xf32> -> vector<8x32xf32>
    %c0_140 = arith.constant 0 : index
    %c0_141 = arith.constant 0 : index
    %208 = vector.load %arg16[%c0_140, %c0_141] : memref<1x32xf32, #tpu.memory_space<vmem>>, vector<1x32xf32>
    %209 = vector.shape_cast %208 : vector<1x32xf32> to vector<32xf32>
    %210 = vector.shape_cast %209 : vector<32xf32> to vector<1x32xf32>
    %211 = vector.broadcast %210 : vector<1x32xf32> to vector<8x32xf32>
    %212 = arith.addf %207, %211 : vector<8x32xf32>
    %213 = arith.addf %155, %212 : vector<8x32xf32>
    %c0_142 = arith.constant 0 : index
    %c0_143 = arith.constant 0 : index
    %c0_144 = arith.constant 0 : index
    %214 = vector.load %arg17[%c0_142, %c0_143, %c0_144] : memref<1x8x32xf32, #tpu.memory_space<vmem>>, vector<1x8x32xf32>
    %215 = vector.shape_cast %214 : vector<1x8x32xf32> to vector<8x32xf32>
    %216 = vector.shape_cast %213 : vector<8x32xf32> to vector<1x8x32xf32>
    tpu.vector_store %arg17[%c0_142, %c0_143, %c0_144], %216 {strides = array<i32>} : memref<1x8x32xf32, #tpu.memory_space<vmem>>, vector<1x8x32xf32>,
    return
  }
  func.func @transform_0(%arg0: i32, %arg1: i32) -> (i32, i32, i32) {
    %c0_i32 = arith.constant 0 : i32
    %c0_i32_0 = arith.constant 0 : i32
    %c0_i32_1 = arith.constant 0 : i32
    return %arg0, %c0_i32, %c0_i32_0 : i32, i32, i32
  }
  func.func @transform_1(%arg0: i32, %arg1: i32) -> (i32, i32) {
    %c0_i32 = arith.constant 0 : i32
    %c0_i32_0 = arith.constant 0 : i32
    %c0_i32_1 = arith.constant 0 : i32
    return %c0_i32, %c0_i32_0 : i32, i32
  }
  func.func @transform_2(%arg0: i32, %arg1: i32) -> (i32, i32) {
    %c0_i32 = arith.constant 0 : i32
    %c0_i32_0 = arith.constant 0 : i32
    %c0_i32_1 = arith.constant 0 : i32
    return %c0_i32, %c0_i32_0 : i32, i32
  }
  func.func @transform_3(%arg0: i32, %arg1: i32) -> (i32, i32) {
    %c0_i32 = arith.constant 0 : i32
    %c0_i32_0 = arith.constant 0 : i32
    %c0_i32_1 = arith.constant 0 : i32
    return %c0_i32, %c0_i32_0 : i32, i32
  }
  func.func @transform_4(%arg0: i32, %arg1: i32) -> (i32, i32) {
    %c0_i32 = arith.constant 0 : i32
    %c0_i32_0 = arith.constant 0 : i32
    %c0_i32_1 = arith.constant 0 : i32
    return %c0_i32, %c0_i32_0 : i32, i32
  }
  func.func @transform_5(%arg0: i32, %arg1: i32) -> (i32, i32) {
    %c0_i32 = arith.constant 0 : i32
    %c0_i32_0 = arith.constant 0 : i32
    %c0_i32_1 = arith.constant 0 : i32
    return %c0_i32, %c0_i32_0 : i32, i32
  }
  func.func @transform_6(%arg0: i32, %arg1: i32) -> (i32, i32) {
    %c0_i32 = arith.constant 0 : i32
    %c0_i32_0 = arith.constant 0 : i32
    %c0_i32_1 = arith.constant 0 : i32
    return %c0_i32, %c0_i32_0 : i32, i32
  }
  func.func @transform_7(%arg0: i32, %arg1: i32) -> (i32, i32, i32) {
    %c0_i32 = arith.constant 0 : i32
    %c0_i32_0 = arith.constant 0 : i32
    %c0_i32_1 = arith.constant 0 : i32
    %c0_i32_2 = arith.constant 0 : i32
    return %c0_i32, %c0_i32_0, %c0_i32_1 : i32, i32, i32
  }
  func.func @transform_8(%arg0: i32, %arg1: i32) -> (i32, i32) {
    %c0_i32 = arith.constant 0 : i32
    %c0_i32_0 = arith.constant 0 : i32
    %c0_i32_1 = arith.constant 0 : i32
    return %c0_i32, %c0_i32_0 : i32, i32
  }
  func.func @transform_9(%arg0: i32, %arg1: i32) -> (i32, i32) {
    %c0_i32 = arith.constant 0 : i32
    %c0_i32_0 = arith.constant 0 : i32
    %c0_i32_1 = arith.constant 0 : i32
    return %c0_i32, %c0_i32_0 : i32, i32
  }
  func.func @transform_10(%arg0: i32, %arg1: i32) -> (i32, i32) {
    %c0_i32 = arith.constant 0 : i32
    %c0_i32_0 = arith.constant 0 : i32
    %c0_i32_1 = arith.constant 0 : i32
    return %c0_i32, %c0_i32_0 : i32, i32
  }
  func.func @transform_11(%arg0: i32, %arg1: i32) -> (i32, i32) {
    %c0_i32 = arith.constant 0 : i32
    %c0_i32_0 = arith.constant 0 : i32
    %c0_i32_1 = arith.constant 0 : i32
    return %c0_i32, %c0_i32_0 : i32, i32
  }
  func.func @transform_12(%arg0: i32, %arg1: i32) -> (i32, i32) {
    %c0_i32 = arith.constant 0 : i32
    %c0_i32_0 = arith.constant 0 : i32
    %c0_i32_1 = arith.constant 0 : i32
    return %c0_i32, %c0_i32_0 : i32, i32
  }
  func.func @transform_13(%arg0: i32, %arg1: i32) -> (i32, i32) {
    %c0_i32 = arith.constant 0 : i32
    %c0_i32_0 = arith.constant 0 : i32
    %c0_i32_1 = arith.constant 0 : i32
    return %c0_i32, %c0_i32_0 : i32, i32
  }
  func.func @transform_14(%arg0: i32, %arg1: i32) -> (i32, i32) {
    %c0_i32 = arith.constant 0 : i32
    %c0_i32_0 = arith.constant 0 : i32
    %c0_i32_1 = arith.constant 0 : i32
    return %c0_i32, %c0_i32_0 : i32, i32
  }
  func.func @transform_15(%arg0: i32, %arg1: i32) -> (i32, i32, i32) {
    %c0_i32 = arith.constant 0 : i32
    %c0_i32_0 = arith.constant 0 : i32
    return %arg0, %arg1, %c0_i32 : i32, i32, i32
  }
}

</mosaic_0001>

<llo_original>
// kernel: tpu_custom_call.1
$region0: #{tpu_custom_call.1}
  #allocation0 [shape = 'u32[]', space=smem, size = 0x4, offset = 0x4, fixed_abs, tag = 'smem constant byte address 0x4 - core index']
  #allocation1 [shape = 'u32[144,128]{1,0:T(1,128)}', space=vmem, size = 0x12000, scoped, tag = 'internal scratch']
  #allocation2 [shape = 'bf16[4,8,8]{2,1,0:T(8,128)(2,1)}', space=vmem, size = 0x2000, scoped, tag = 'scratch operand']
  #allocation3 [shape = 'bf16[4,8,8]{2,1,0:T(8,128)(2,1)}', space=vmem, size = 0x2000, scoped, tag = 'scratch operand']
  #allocation4 [shape = 'f32[8,1]{1,0:T(8,128)}', space=vmem, size = 0x1000, scoped, tag = 'scratch operand']
  #allocation5 [shape = 'f32[8,1]{1,0:T(8,128)}', space=vmem, size = 0x1000, scoped, tag = 'scratch operand']
  #allocation6 [shape = 'f32[8,8]{1,0:T(8,128)}', space=vmem, size = 0x1000, scoped, tag = 'scratch operand']
  %s0 = inlined_call_operand.vmem [shape: f32[2,8,32], index: 0, kind: input, shape index: {}]
  %s1 = inlined_call_operand.vmem [shape: f32[1,32], index: 1, kind: input, shape index: {}]
  %s2 = inlined_call_operand.vmem [shape: f32[1,32], index: 2, kind: input, shape index: {}]
  %s3 = inlined_call_operand.vmem [shape: bf16[32,32], index: 3, kind: input, shape index: {}]
  %s4 = inlined_call_operand.vmem [shape: f32[1,32], index: 4, kind: input, shape index: {}]
  %s5 = inlined_call_operand.vmem [shape: bf16[32,64], index: 5, kind: input, shape index: {}]
  %s6 = inlined_call_operand.vmem [shape: f32[1,64], index: 6, kind: input, shape index: {}]
  %s7 = inlined_call_operand.vmem [shape: bf16[4,8,32], index: 7, kind: input, shape index: {}]
  %s8 = inlined_call_operand.vmem [shape: f32[1,32], index: 8, kind: input, shape index: {}]
  %s9 = inlined_call_operand.vmem [shape: f32[1,32], index: 9, kind: input, shape index: {}]
  %s10 = inlined_call_operand.vmem [shape: f32[1,32], index: 10, kind: input, shape index: {}]
  %s11 = inlined_call_operand.vmem [shape: bf16[32,128], index: 11, kind: input, shape index: {}]
  %s12 = inlined_call_operand.vmem [shape: f32[1,128], index: 12, kind: input, shape index: {}]
  %s13 = inlined_call_operand.vmem [shape: bf16[128,32], index: 13, kind: input, shape index: {}]
  %s14 = inlined_call_operand.vmem [shape: f32[1,32], index: 14, kind: input, shape index: {}]
  %s15 = inlined_call_operand.hbm [shape: f32[2,8,32], index: 15, kind: output, shape index: {}]
  %s16 = sld [smem:[#allocation0]]
  $region125: #{tpu_custom_call.1} parent=0
    _
  %s18 = ssub.s32 1, %s16
  %s19 = scalar_select 0, %s18, %s16
  $region1: #{tpu_custom_call.1} parent=0
    #allocation7 [shape = 'u8[8192]{0}', space=vmem, size = 0x2000, scoped, tag = 'output window, operand 0']
    #allocation8 [shape = 's32[2]{0}', space=sflag, size = 0x8, scoped, tag = 'scoped memory for tpu_custom_call.1']
    %20 = vsyncpa [#allocation8], 0
    %s21 = scalar_lea.sflag [#allocation8], 1
    %22 = vsyncpa %s21, 0
    loop: start=0, step=1, limit=4
    $region2: #{tpu_custom_call.1} parent=1 // loop_pre_header
      _
    $region3: #{tpu_custom_call.1} parent=1 // loop_header
      %s24 = sphi 0, %s28
      %p25 = scmp.ge.s32.totalorder %s24, 4
      %s31 = sphi 0, %s43
      %s32 = sphi 0, %s39
      %s33 = sphi 0, %s31
      %s34 = sphi 0, %s32
      %s35 = sphi 0, %s33
      %s36 = sphi 0, %s34
      %s46 = sphi 0, %s48
      %s49 = sphi 0, %s46
      %s50 = sphi 0, %s49
      %s66 = sphi 0, %s50
      %s70 = sphi 0, %s70
      %s72 = sphi 0, %s70
      %s73 = sphi 0, %s72
      %s87 = sphi 0, %s73
      %s91 = sphi 0, %s91
      %s93 = sphi 0, %s91
      %s94 = sphi 0, %s93
      %s108 = sphi 0, %s94
      %s112 = sphi 0, %s112
      %s114 = sphi 0, %s112
      %s115 = sphi 0, %s114
      %s129 = sphi 0, %s115
      %s133 = sphi 0, %s133
      %s135 = sphi 0, %s133
      %s136 = sphi 0, %s135
      %s150 = sphi 0, %s136
      %s154 = sphi 0, %s154
      %s156 = sphi 0, %s154
      %s157 = sphi 0, %s156
      %s171 = sphi 0, %s157
      %s175 = sphi 0, %s175
      %s177 = sphi 0, %s175
      %s178 = sphi 0, %s177
      %s192 = sphi 0, %s178
      %s196 = sphi 0, %s196
      %s198 = sphi 0, %s196
      %s199 = sphi 0, %s198
      %s213 = sphi 0, %s199
      %s217 = sphi 0, %s217
      %s219 = sphi 0, %s217
      %s220 = sphi 0, %s219
      %s234 = sphi 0, %s220
      %s238 = sphi 0, %s238
      %s240 = sphi 0, %s238
      %s241 = sphi 0, %s240
      %s255 = sphi 0, %s241
      %s259 = sphi 0, %s259
      %s261 = sphi 0, %s259
      %s262 = sphi 0, %s261
      %s276 = sphi 0, %s262
      %s280 = sphi 0, %s280
      %s282 = sphi 0, %s280
      %s283 = sphi 0, %s282
      %s297 = sphi 0, %s283
      %s301 = sphi 0, %s301
      %s303 = sphi 0, %s301
      %s304 = sphi 0, %s303
      %s318 = sphi 0, %s304
      %s322 = sphi 0, %s322
      %s324 = sphi 0, %s322
      %s325 = sphi 0, %s324
      %s339 = sphi 0, %s325
      %s343 = sphi 0, %s343
      %s345 = sphi 0, %s343
      %s346 = sphi 0, %s345
      %s360 = sphi 0, %s346
      %s368 = sphi 0, %s370
      %s371 = sphi 0, %s368
      %s372 = sphi 0, %s371
      %s388 = sphi 0, %s372
    $region4: #{tpu_custom_call.1} parent=1 // loop_header_branch
      %27 = sbr.rel (%p25) target = $region8
    $region5: #{tpu_custom_call.1} parent=1 // loop_body
      %s29 = ssub.s32 %s24, 1
      %s30 = ssub.s32 %s24, 2
      %s37 = sadd.s32 1, %s32
      %p38 = scmp.ge.s32.totalorder %s37, 1
      %s39 = scalar_select %p38, 0, %s37
      %s40 = sadd.s32 1, %s31
      %s41 = scalar_select %p38, %s40, %s31
      %p42 = scmp.ge.s32.totalorder %s41, 2
      %s43 = scalar_select %p42, 0, %s41
      %s44 = ssub.s32 %s31, %s43
      %p45 = scmp.eq.s32.totalorder %s44, 0
      %s47 = sadd.s32 %s46, 1
      %s48 = scalar_select %p45, %s46, %s47
      %p51 = pneg %p45
      %p52 = scmp.eq.s32.totalorder %s24, 1
      %p53 = por %p51, %p52
      %p54 = scmp.ne.s32.totalorder %s46, %s49
      %p55 = scmp.eq.s32.totalorder %s24, 0
      %p56 = por %p54, %p55
      %p57 = scmp.ne.s32.totalorder %s46, %s49
      %p58 = scmp.eq.s32.totalorder %s29, 1
      %p59 = por %p57, %p58
      %p60 = scmp.ne.s32.totalorder %s49, %s50
      %p61 = scmp.eq.s32.totalorder %s29, 0
      %p62 = por %p60, %p61
      %p63 = scmp.ne.s32.totalorder %s49, %s50
      %p64 = scmp.eq.s32.totalorder %s30, 1
      %p65 = por %p63, %p64
      %p67 = scmp.ne.s32.totalorder %s50, %s66
      %p68 = scmp.eq.s32.totalorder %s30, 0
      %p69 = por %p67, %p68
      %s71 = sadd.s32 %s70, 1
      %p74 = scmp.eq.s32.totalorder %s24, 1
      %p75 = scmp.ne.s32.totalorder %s70, %s72
      %p76 = scmp.eq.s32.totalorder %s24, 0
      %p77 = por %p75, %p76
      %p78 = scmp.ne.s32.totalorder %s70, %s72
      %p79 = scmp.eq.s32.totalorder %s29, 1
      %p80 = por %p78, %p79
      %p81 = scmp.ne.s32.totalorder %s72, %s73
      %p82 = scmp.eq.s32.totalorder %s29, 0
      %p83 = por %p81, %p82
      %p84 = scmp.ne.s32.totalorder %s72, %s73
      %p85 = scmp.eq.s32.totalorder %s30, 1
      %p86 = por %p84, %p85
      %p88 = scmp.ne.s32.totalorder %s73, %s87
      %p89 = scmp.eq.s32.totalorder %s30, 0
      %p90 = por %p88, %p89
      %s92 = sadd.s32 %s91, 1
      %p95 = scmp.eq.s32.totalorder %s24, 1
      %p96 = scmp.ne.s32.totalorder %s91, %s93
      %p97 = scmp.eq.s32.totalorder %s24, 0
      %p98 = por %p96, %p97
      %p99 = scmp.ne.s32.totalorder %s91, %s93
      %p100 = scmp.eq.s32.totalorder %s29, 1
      %p101 = por %p99, %p100
      %p102 = scmp.ne.s32.totalorder %s93, %s94
      %p103 = scmp.eq.s32.totalorder %s29, 0
      %p104 = por %p102, %p103
      %p105 = scmp.ne.s32.totalorder %s93, %s94
      %p106 = scmp.eq.s32.totalorder %s30, 1
      %p107 = por %p105, %p106
      %p109 = scmp.ne.s32.totalorder %s94, %s108
      %p110 = scmp.eq.s32.totalorder %s30, 0
      %p111 = por %p109, %p110
      %s113 = sadd.s32 %s112, 1
      %p116 = scmp.eq.s32.totalorder %s24, 1
      %p117 = scmp.ne.s32.totalorder %s112, %s114
      %p118 = scmp.eq.s32.totalorder %s24, 0
      %p119 = por %p117, %p118
      %p120 = scmp.ne.s32.totalorder %s112, %s114
      %p121 = scmp.eq.s32.totalorder %s29, 1
      %p122 = por %p120, %p121
      %p123 = scmp.ne.s32.totalorder %s114, %s115
      %p124 = scmp.eq.s32.totalorder %s29, 0
      %p125 = por %p123, %p124
      %p126 = scmp.ne.s32.totalorder %s114, %s115
      %p127 = scmp.eq.s32.totalorder %s30, 1
      %p128 = por %p126, %p127
      %p130 = scmp.ne.s32.totalorder %s115, %s129
      %p131 = scmp.eq.s32.totalorder %s30, 0
      %p132 = por %p130, %p131
      %s134 = sadd.s32 %s133, 1
      %p137 = scmp.eq.s32.totalorder %s24, 1
      %p138 = scmp.ne.s32.totalorder %s133, %s135
      %p139 = scmp.eq.s32.totalorder %s24, 0
      %p140 = por %p138, %p139
      %p141 = scmp.ne.s32.totalorder %s133, %s135
      %p142 = scmp.eq.s32.totalorder %s29, 1
      %p143 = por %p141, %p142
      %p144 = scmp.ne.s32.totalorder %s135, %s136
      %p145 = scmp.eq.s32.totalorder %s29, 0
      %p146 = por %p144, %p145
      %p147 = scmp.ne.s32.totalorder %s135, %s136
      %p148 = scmp.eq.s32.totalorder %s30, 1
      %p149 = por %p147, %p148
      %p151 = scmp.ne.s32.totalorder %s136, %s150
      %p152 = scmp.eq.s32.totalorder %s30, 0
      %p153 = por %p151, %p152
      %s155 = sadd.s32 %s154, 1
      %p158 = scmp.eq.s32.totalorder %s24, 1
      %p159 = scmp.ne.s32.totalorder %s154, %s156
      %p160 = scmp.eq.s32.totalorder %s24, 0
      %p161 = por %p159, %p160
      %p162 = scmp.ne.s32.totalorder %s154, %s156
      %p163 = scmp.eq.s32.totalorder %s29, 1
      %p164 = por %p162, %p163
      %p165 = scmp.ne.s32.totalorder %s156, %s157
      %p166 = scmp.eq.s32.totalorder %s29, 0
      %p167 = por %p165, %p166
      %p168 = scmp.ne.s32.totalorder %s156, %s157
      %p169 = scmp.eq.s32.totalorder %s30, 1
      %p170 = por %p168, %p169
      %p172 = scmp.ne.s32.totalorder %s157, %s171
      %p173 = scmp.eq.s32.totalorder %s30, 0
      %p174 = por %p172, %p173
      %s176 = sadd.s32 %s175, 1
      %p179 = scmp.eq.s32.totalorder %s24, 1
      %p180 = scmp.ne.s32.totalorder %s175, %s177
      %p181 = scmp.eq.s32.totalorder %s24, 0
      %p182 = por %p180, %p181
      %p183 = scmp.ne.s32.totalorder %s175, %s177
      %p184 = scmp.eq.s32.totalorder %s29, 1
      %p185 = por %p183, %p184
      %p186 = scmp.ne.s32.totalorder %s177, %s178
      %p187 = scmp.eq.s32.totalorder %s29, 0
      %p188 = por %p186, %p187
      %p189 = scmp.ne.s32.totalorder %s177, %s178
      %p190 = scmp.eq.s32.totalorder %s30, 1
      %p191 = por %p189, %p190
      %p193 = scmp.ne.s32.totalorder %s178, %s192
      %p194 = scmp.eq.s32.totalorder %s30, 0
      %p195 = por %p193, %p194
      %s197 = sadd.s32 %s196, 1
      %p200 = scmp.eq.s32.totalorder %s24, 1
      %p201 = scmp.ne.s32.totalorder %s196, %s198
      %p202 = scmp.eq.s32.totalorder %s24, 0
      %p203 = por %p201, %p202
      %p204 = scmp.ne.s32.totalorder %s196, %s198
      %p205 = scmp.eq.s32.totalorder %s29, 1
      %p206 = por %p204, %p205
      %p207 = scmp.ne.s32.totalorder %s198, %s199
      %p208 = scmp.eq.s32.totalorder %s29, 0
      %p209 = por %p207, %p208
      %p210 = scmp.ne.s32.totalorder %s198, %s199
      %p211 = scmp.eq.s32.totalorder %s30, 1
      %p212 = por %p210, %p211
      %p214 = scmp.ne.s32.totalorder %s199, %s213
      %p215 = scmp.eq.s32.totalorder %s30, 0
      %p216 = por %p214, %p215
      %s218 = sadd.s32 %s217, 1
      %p221 = scmp.eq.s32.totalorder %s24, 1
      %p222 = scmp.ne.s32.totalorder %s217, %s219
      %p223 = scmp.eq.s32.totalorder %s24, 0
      %p224 = por %p222, %p223
      %p225 = scmp.ne.s32.totalorder %s217, %s219
      %p226 = scmp.eq.s32.totalorder %s29, 1
      %p227 = por %p225, %p226
      %p228 = scmp.ne.s32.totalorder %s219, %s220
      %p229 = scmp.eq.s32.totalorder %s29, 0
      %p230 = por %p228, %p229
      %p231 = scmp.ne.s32.totalorder %s219, %s220
      %p232 = scmp.eq.s32.totalorder %s30, 1
      %p233 = por %p231, %p232
      %p235 = scmp.ne.s32.totalorder %s220, %s234
      %p236 = scmp.eq.s32.totalorder %s30, 0
      %p237 = por %p235, %p236
      %s239 = sadd.s32 %s238, 1
      %p242 = scmp.eq.s32.totalorder %s24, 1
      %p243 = scmp.ne.s32.totalorder %s238, %s240
      %p244 = scmp.eq.s32.totalorder %s24, 0
      %p245 = por %p243, %p244
      %p246 = scmp.ne.s32.totalorder %s238, %s240
      %p247 = scmp.eq.s32.totalorder %s29, 1
      %p248 = por %p246, %p247
      %p249 = scmp.ne.s32.totalorder %s240, %s241
      %p250 = scmp.eq.s32.totalorder %s29, 0
      %p251 = por %p249, %p250
      %p252 = scmp.ne.s32.totalorder %s240, %s241
      %p253 = scmp.eq.s32.totalorder %s30, 1
      %p254 = por %p252, %p253
      %p256 = scmp.ne.s32.totalorder %s241, %s255
      %p257 = scmp.eq.s32.totalorder %s30, 0
      %p258 = por %p256, %p257
      %s260 = sadd.s32 %s259, 1
      %p263 = scmp.eq.s32.totalorder %s24, 1
      %p264 = scmp.ne.s32.totalorder %s259, %s261
      %p265 = scmp.eq.s32.totalorder %s24, 0
      %p266 = por %p264, %p265
      %p267 = scmp.ne.s32.totalorder %s259, %s261
      %p268 = scmp.eq.s32.totalorder %s29, 1
      %p269 = por %p267, %p268
      %p270 = scmp.ne.s32.totalorder %s261, %s262
      %p271 = scmp.eq.s32.totalorder %s29, 0
      %p272 = por %p270, %p271
      %p273 = scmp.ne.s32.totalorder %s261, %s262
      %p274 = scmp.eq.s32.totalorder %s30, 1
      %p275 = por %p273, %p274
      %p277 = scmp.ne.s32.totalorder %s262, %s276
      %p278 = scmp.eq.s32.totalorder %s30, 0
      %p279 = por %p277, %p278
      %s281 = sadd.s32 %s280, 1
      %p284 = scmp.eq.s32.totalorder %s24, 1
      %p285 = scmp.ne.s32.totalorder %s280, %s282
      %p286 = scmp.eq.s32.totalorder %s24, 0
      %p287 = por %p285, %p286
      %p288 = scmp.ne.s32.totalorder %s280, %s282
      %p289 = scmp.eq.s32.totalorder %s29, 1
      %p290 = por %p288, %p289
      %p291 = scmp.ne.s32.totalorder %s282, %s283
      %p292 = scmp.eq.s32.totalorder %s29, 0
      %p293 = por %p291, %p292
      %p294 = scmp.ne.s32.totalorder %s282, %s283
      %p295 = scmp.eq.s32.totalorder %s30, 1
      %p296 = por %p294, %p295
      %p298 = scmp.ne.s32.totalorder %s283, %s297
      %p299 = scmp.eq.s32.totalorder %s30, 0
      %p300 = por %p298, %p299
      %s302 = sadd.s32 %s301, 1
      %p305 = scmp.eq.s32.totalorder %s24, 1
      %p306 = scmp.ne.s32.totalorder %s301, %s303
      %p307 = scmp.eq.s32.totalorder %s24, 0
      %p308 = por %p306, %p307
      %p309 = scmp.ne.s32.totalorder %s301, %s303
      %p310 = scmp.eq.s32.totalorder %s29, 1
      %p311 = por %p309, %p310
      %p312 = scmp.ne.s32.totalorder %s303, %s304
      %p313 = scmp.eq.s32.totalorder %s29, 0
      %p314 = por %p312, %p313
      %p315 = scmp.ne.s32.totalorder %s303, %s304
      %p316 = scmp.eq.s32.totalorder %s30, 1
      %p317 = por %p315, %p316
      %p319 = scmp.ne.s32.totalorder %s304, %s318
      %p320 = scmp.eq.s32.totalorder %s30, 0
      %p321 = por %p319, %p320
      %s323 = sadd.s32 %s322, 1
      %p326 = scmp.eq.s32.totalorder %s24, 1
      %p327 = scmp.ne.s32.totalorder %s322, %s324
      %p328 = scmp.eq.s32.totalorder %s24, 0
      %p329 = por %p327, %p328
      %p330 = scmp.ne.s32.totalorder %s322, %s324
      %p331 = scmp.eq.s32.totalorder %s29, 1
      %p332 = por %p330, %p331
      %p333 = scmp.ne.s32.totalorder %s324, %s325
      %p334 = scmp.eq.s32.totalorder %s29, 0
      %p335 = por %p333, %p334
      %p336 = scmp.ne.s32.totalorder %s324, %s325
      %p337 = scmp.eq.s32.totalorder %s30, 1
      %p338 = por %p336, %p337
      %p340 = scmp.ne.s32.totalorder %s325, %s339
      %p341 = scmp.eq.s32.totalorder %s30, 0
      %p342 = por %p340, %p341
      %s344 = sadd.s32 %s343, 1
      %p347 = scmp.eq.s32.totalorder %s24, 1
      %p348 = scmp.ne.s32.totalorder %s343, %s345
      %p349 = scmp.eq.s32.totalorder %s24, 0
      %p350 = por %p348, %p349
      %p351 = scmp.ne.s32.totalorder %s343, %s345
      %p352 = scmp.eq.s32.totalorder %s29, 1
      %p353 = por %p351, %p352
      %p354 = scmp.ne.s32.totalorder %s345, %s346
      %p355 = scmp.eq.s32.totalorder %s29, 0
      %p356 = por %p354, %p355
      %p357 = scmp.ne.s32.totalorder %s345, %s346
      %p358 = scmp.eq.s32.totalorder %s30, 1
      %p359 = por %p357, %p358
      %p361 = scmp.ne.s32.totalorder %s346, %s360
      %p362 = scmp.eq.s32.totalorder %s30, 0
      %p363 = por %p361, %p362
      %s364 = ssub.s32 %s31, %s43
      %s365 = ssub.s32 %s32, %s39
      %s366 = sor.u32 %s364, %s365
      %p367 = scmp.eq.s32.totalorder %s366, 0
      %s369 = sadd.s32 %s368, 1
      %s370 = scalar_select %p367, %s368, %s369
      %p373 = pneg %p367
      %p374 = scmp.eq.s32.totalorder %s24, 1
      %p375 = por %p373, %p374
      %p376 = scmp.ne.s32.totalorder %s368, %s371
      %p377 = scmp.eq.s32.totalorder %s24, 0
      %p378 = por %p376, %p377
      %p379 = scmp.ne.s32.totalorder %s368, %s371
      %p380 = scmp.eq.s32.totalorder %s29, 1
      %p381 = por %p379, %p380
      %p382 = scmp.ne.s32.totalorder %s371, %s372
      %p383 = scmp.eq.s32.totalorder %s29, 0
      %p384 = por %p382, %p383
      %p385 = scmp.ne.s32.totalorder %s371, %s372
      %p386 = scmp.eq.s32.totalorder %s30, 1
      %p387 = por %p385, %p386
      %p389 = scmp.ne.s32.totalorder %s372, %s388
      %p390 = scmp.eq.s32.totalorder %s30, 0
      %p391 = por %p389, %p390
      %p392 = scmp.le.s32.totalorder 1, %s24
      %p393 = scmp.lt.s32.totalorder %s24, 3
      %p394 = pnand %p392, %p393
      %p395 = pneg %p394
      // Predicated region
      $region9: #{tpu_custom_call.1} parent=5 // pred_check
        _
      $region10: #{tpu_custom_call.1} parent=5 // pred_check_branch
        %397 = sbr.rel (%p394) target = $region12
      $region11: #{tpu_custom_call.1} parent=5 // pred_region
        %s398 = ssub.s32 %s24, 1
        // Predicated region
        $region13: #{tpu_custom_call.1} parent=11 // pred_check
          %p399 = pneg %p83
        $region14: #{tpu_custom_call.1} parent=11 // pred_check_branch
          %401 = sbr.rel (%p399) target = $region16
        $region15: #{tpu_custom_call.1} parent=11 // pred_region
          _
        $region16: #{tpu_custom_call.1} parent=11 // pred_fallthru
          _
        // Predicated region
        $region17: #{tpu_custom_call.1} parent=11 // pred_check
          %p402 = pneg %p104
        $region18: #{tpu_custom_call.1} parent=11 // pred_check_branch
          %404 = sbr.rel (%p402) target = $region20
        $region19: #{tpu_custom_call.1} parent=11 // pred_region
          _
        $region20: #{tpu_custom_call.1} parent=11 // pred_fallthru
          _
        // Predicated region
        $region21: #{tpu_custom_call.1} parent=11 // pred_check
          %p405 = pneg %p125
        $region22: #{tpu_custom_call.1} parent=11 // pred_check_branch
          %407 = sbr.rel (%p405) target = $region24
        $region23: #{tpu_custom_call.1} parent=11 // pred_region
          _
        $region24: #{tpu_custom_call.1} parent=11 // pred_fallthru
          _
        // Predicated region
        $region25: #{tpu_custom_call.1} parent=11 // pred_check
          %p408 = pneg %p146
        $region26: #{tpu_custom_call.1} parent=11 // pred_check_branch
          %410 = sbr.rel (%p408) target = $region28
        $region27: #{tpu_custom_call.1} parent=11 // pred_region
          _
        $region28: #{tpu_custom_call.1} parent=11 // pred_fallthru
          _
        // Predicated region
        $region29: #{tpu_custom_call.1} parent=11 // pred_check
          %p411 = pneg %p167
        $region30: #{tpu_custom_call.1} parent=11 // pred_check_branch
          %413 = sbr.rel (%p411) target = $region32
        $region31: #{tpu_custom_call.1} parent=11 // pred_region
          _
        $region32: #{tpu_custom_call.1} parent=11 // pred_fallthru
          _
        // Predicated region
        $region33: #{tpu_custom_call.1} parent=11 // pred_check
          %p414 = pneg %p188
        $region34: #{tpu_custom_call.1} parent=11 // pred_check_branch
          %416 = sbr.rel (%p414) target = $region36
        $region35: #{tpu_custom_call.1} parent=11 // pred_region
          _
        $region36: #{tpu_custom_call.1} parent=11 // pred_fallthru
          _
        // Predicated region
        $region37: #{tpu_custom_call.1} parent=11 // pred_check
          %p417 = pneg %p209
        $region38: #{tpu_custom_call.1} parent=11 // pred_check_branch
          %419 = sbr.rel (%p417) target = $region40
        $region39: #{tpu_custom_call.1} parent=11 // pred_region
          _
        $region40: #{tpu_custom_call.1} parent=11 // pred_fallthru
          _
        // Predicated region
        $region41: #{tpu_custom_call.1} parent=11 // pred_check
          %p420 = pneg %p230
        $region42: #{tpu_custom_call.1} parent=11 // pred_check_branch
          %422 = sbr.rel (%p420) target = $region44
        $region43: #{tpu_custom_call.1} parent=11 // pred_region
          _
        $region44: #{tpu_custom_call.1} parent=11 // pred_fallthru
          _
        // Predicated region
        $region45: #{tpu_custom_call.1} parent=11 // pred_check
          %p423 = pneg %p251
        $region46: #{tpu_custom_call.1} parent=11 // pred_check_branch
          %425 = sbr.rel (%p423) target = $region48
        $region47: #{tpu_custom_call.1} parent=11 // pred_region
          _
        $region48: #{tpu_custom_call.1} parent=11 // pred_fallthru
          _
        // Predicated region
        $region49: #{tpu_custom_call.1} parent=11 // pred_check
          %p426 = pneg %p272
        $region50: #{tpu_custom_call.1} parent=11 // pred_check_branch
          %428 = sbr.rel (%p426) target = $region52
        $region51: #{tpu_custom_call.1} parent=11 // pred_region
          _
        $region52: #{tpu_custom_call.1} parent=11 // pred_fallthru
          _
        // Predicated region
        $region53: #{tpu_custom_call.1} parent=11 // pred_check
          %p429 = pneg %p293
        $region54: #{tpu_custom_call.1} parent=11 // pred_check_branch
          %431 = sbr.rel (%p429) target = $region56
        $region55: #{tpu_custom_call.1} parent=11 // pred_region
          _
        $region56: #{tpu_custom_call.1} parent=11 // pred_fallthru
          _
        // Predicated region
        $region57: #{tpu_custom_call.1} parent=11 // pred_check
          %p432 = pneg %p314
        $region58: #{tpu_custom_call.1} parent=11 // pred_check_branch
          %434 = sbr.rel (%p432) target = $region60
        $region59: #{tpu_custom_call.1} parent=11 // pred_region
          _
        $region60: #{tpu_custom_call.1} parent=11 // pred_fallthru
          _
        // Predicated region
        $region61: #{tpu_custom_call.1} parent=11 // pred_check
          %p435 = pneg %p335
        $region62: #{tpu_custom_call.1} parent=11 // pred_check_branch
          %437 = sbr.rel (%p435) target = $region64
        $region63: #{tpu_custom_call.1} parent=11 // pred_region
          _
        $region64: #{tpu_custom_call.1} parent=11 // pred_fallthru
          _
        // Predicated region
        $region65: #{tpu_custom_call.1} parent=11 // pred_check
          %p438 = pneg %p356
        $region66: #{tpu_custom_call.1} parent=11 // pred_check_branch
          %440 = sbr.rel (%p438) target = $region68
        $region67: #{tpu_custom_call.1} parent=11 // pred_region
          _
        $region68: #{tpu_custom_call.1} parent=11 // pred_fallthru
          _
      $region12: #{tpu_custom_call.1} parent=5 // pred_fallthru
        _
      %p441 = scmp.lt.s32.totalorder %s24, 2
      // Predicated region
      $region69: #{tpu_custom_call.1} parent=5 // pred_check
        %p442 = pneg %p441
      $region70: #{tpu_custom_call.1} parent=5 // pred_check_branch
        %444 = sbr.rel (%p442) target = $region72
      $region71: #{tpu_custom_call.1} parent=5 // pred_region
        // Predicated region
        $region73: #{tpu_custom_call.1} parent=71 // pred_check
          %p445 = pneg %p56
        $region74: #{tpu_custom_call.1} parent=71 // pred_check_branch
          %447 = sbr.rel (%p445) target = $region76
        $region75: #{tpu_custom_call.1} parent=71 // pred_region
          %p448 = scmp.lt.s32.totalorder %s31, 1
          %s449 = scalar_select %p448, %s31, 1
          %s450 = smul.addr %s449, 8
          %s451 = scalar_lea.vmem %s0, %s450
        $region76: #{tpu_custom_call.1} parent=71 // pred_fallthru
          _
      $region72: #{tpu_custom_call.1} parent=5 // pred_fallthru
        _
      %p452 = scmp.le.s32.totalorder 1, %s24
      %p453 = scmp.lt.s32.totalorder %s24, 3
      %p454 = pnand %p452, %p453
      %p455 = pneg %p454
      // Predicated region
      $region77: #{tpu_custom_call.1} parent=5 // pred_check
        _
      $region78: #{tpu_custom_call.1} parent=5 // pred_check_branch
        %457 = sbr.rel (%p454) target = $region80
      $region79: #{tpu_custom_call.1} parent=5 // pred_region
        %s458 = ssub.s32 %s24, 1
        %p459 = scmp.lt.s32.totalorder %s33, 1
        %s460 = scalar_select %p459, %s33, 1
        %s461 = smul.addr %s460, 8
        %s462 = scalar_lea.vmem %s0, %s461
        %p463 = pneg %p62
        %p464 = pneg %p59
        %p465 = pneg %p83
        %p466 = pneg %p80
        %p467 = pneg %p104
        %p468 = pneg %p101
        %p469 = pneg %p125
        %p470 = pneg %p122
        %p471 = pneg %p146
        %p472 = pneg %p143
        %p473 = pneg %p167
        %p474 = pneg %p164
        %p475 = pneg %p188
        %p476 = pneg %p185
        %p477 = pneg %p209
        %p478 = pneg %p206
        %p479 = pneg %p230
        %p480 = pneg %p227
        %p481 = pneg %p251
        %p482 = pneg %p248
        %p483 = pneg %p272
        %p484 = pneg %p269
        %p485 = pneg %p293
        %p486 = pneg %p290
        %p487 = pneg %p314
        %p488 = pneg %p311
        %p489 = pneg %p335
        %p490 = pneg %p332
        %p491 = pneg %p356
        %p492 = pneg %p353
        %p493 = pneg %p384
        %p494 = pneg %p381
        %s495 = sand.u32 %s371, 1
        %s496 = scalar_lea.sflag [#allocation8], %s495
        %s497 = sand.u32 %s371, 1
        %s498 = smul.addr %s497, 8
        %s499 = scalar_lea.vmem [#allocation7], %s498
        %p500 = scmp.lt.s32.totalorder %s33, 1
        %s501 = scalar_select %p500, %s33, 1
        %s502 = smul.addr %s501, 8
        %s503 = scalar_lea.vmem %s0, %s502
        %v505 = vld [vmem:[%s1] sm:$0x1]
        %v506 = vld [vmem:[%s2] sm:$0x1]
        %p507 = scmp.eq.s32.totalorder %s34, 0
        // Predicated region
        $region81: #{tpu_custom_call.1} parent=79 // pred_check
          %p508 = pneg %p507
        $region82: #{tpu_custom_call.1} parent=79 // pred_check_branch
          %510 = sbr.rel (%p508) target = $region84
        $region83: #{tpu_custom_call.1} parent=79 // pred_region
          %v511 = vld [vmem:[%s503] sm:$0xff]
          %vm512 = vcmask 261120
          %v513 = vsel %vm512, %v511, 0.0
          %514 = vadd.xlane.f32.xlu0 %v513
          %v515 = vpop.xlane.xlu0 %514
          %v516 = vrcp.pop 32.0
          %v517 = vmul.f32 %v515, %v516
          %v518 = vsub.f32 %v511, %v517
          %v519 = vmul.f32 %v518, %v518
          %v520 = vsel %vm512, %v519, 0.0
          %521 = vadd.xlane.f32.xlu0 %v520
          %v522 = vpop.xlane.xlu0 %521
          %v523 = vmul.f32 %v522, %v516
          %v524 = vadd.f32 %v523, 1e-05
          %v525 = vrsqrt.pop %v524
          %v526 = vmul.f32 %v518, %v525
          %v528 = vlaneseq
          %v529 = vshrl.u32 %v528, 7
          %v530 = vsub.s32 0, %v529
          %v531 = vrot.slane %v505, %v530
          %v533 = vmul.f32 %v526, %v531
          %v535 = vlaneseq
          %v536 = vshrl.u32 %v535, 7
          %v537 = vsub.s32 0, %v536
          %v538 = vrot.slane %v506, %v537
          %v540 = vadd.f32 %v533, %v538
          %v541 = vpack.c.bf16 %v540, %v540
          %v542 = vld [vmem:[%s5] sm:$0xf]
          %v543 = vld [vmem:[%s5 + $0x4] sm:$0xf]
          %v544 = vld [vmem:[%s5 + $0x8] sm:$0xf]
          %v545 = vld [vmem:[%s5 + $0xc] sm:$0xf]
          %v546 = vld [vmem:[%s6] sm:$0x1]
          %v548 = vlaneseq
          %v549 = vshrl.u32 %v548, 7
          %v550 = vsub.s32 0, %v549
          %v551 = vrot.slane %v546, %v550
          %v557 = vunpack.c.l.b16 %v542
          %v558 = vunpack.c.l.b16 %v543
          %v559 = vunpack.c.l.b16 %v544
          %v560 = vunpack.c.l.b16 %v545
          %v561 = vpack.c.b16 %v558, %v557
          %v562 = vpack.c.b16 %v560, %v559
          %v566 = vsel %vm512, %v541, 0
          %568 = vmatprep.subr.bf16.mxu0 0
          %569 = vmatpush1.bf16.msra.mxu0 %v561
          %570 = vmatprep.subr.bf16.mxu0 0
          %571 = vmatpush1.bf16.msra.mxu0 %v562
          %572 = vmatprep.subr.bf16.mxu0 0
          %573 = vmatpush1.bf16.msra.mxu0 0
          %574 = vmatprep.subr.bf16.mxu0 0
          %575 = vmatpush1.bf16.msra.mxu0 0
          %576 = vmatprep.subr.bf16.mxu0 0
          %577 = vmatpush1.bf16.msra.mxu0 0
          %578 = vmatprep.subr.bf16.mxu0 0
          %579 = vmatpush1.bf16.msra.mxu0 0
          %580 = vmatprep.subr.bf16.mxu0 0
          %581 = vmatpush1.bf16.msra.mxu0 0
          %582 = vmatprep.subr.bf16.mxu0 0
          %583 = vmatpush1.bf16.msra.mxu0 0
          %584 = vmatprep.subr.bf16.mxu0 0
          %585 = vmatpush1.bf16.msra.mxu0 0
          %586 = vmatprep.subr.bf16.mxu0 0
          %587 = vmatpush1.bf16.msra.mxu0 0
          %588 = vmatprep.subr.bf16.mxu0 0
          %589 = vmatpush1.bf16.msra.mxu0 0
          %590 = vmatprep.subr.bf16.mxu0 0
          %591 = vmatpush1.bf16.msra.mxu0 0
          %592 = vmatprep.subr.bf16.mxu0 0
          %593 = vmatpush1.bf16.msra.mxu0 0
          %594 = vmatprep.subr.bf16.mxu0 0
          %595 = vmatpush1.bf16.msra.mxu0 0
          %596 = vmatprep.subr.bf16.mxu0 0
          %597 = vmatpush1.bf16.msra.mxu0 0
          %598 = vmatprep.subr.bf16.mxu0 0
          %599 = vmatpush1.bf16.msra.mxu0 0
          %600 = vmatprep.mubr.bf16.mxu0 0
          %601 = vmatmul.mubr.bf16.gmra.mrb[0].mxu0 %v566
          %v602 = vpop.f32.mrb[0].mxu0
          %v603 = vadd.f32 %v551, %v602
          %v604 = vpop.f32.mrb[0].mxu0
          %v605 = vpop.f32.mrb[0].mxu0
          %v606 = vpop.f32.mrb[0].mxu0
          %607 = vdwg.mxu0
          %v608 = vpack.c.bf16 %v603, %v603
          %vm609 = vcmask 60416
          %610 = vst.msk [vmem:[#allocation2] sm:$0xf] %vm609, %v608
          %v612 = vunpack.c.l.b16 %v608
          %v613 = vpack.c.b16 %v612, %v612
          %614 = vrot.lane.b32.xlu0 %v613, 96
          %v615 = vpop.permute.xlu0 %614
          %617 = vst.msk [vmem:[#allocation3] sm:$0xf] %vm609, %v615
          %618 = vrot.lane.b32.xlu0 %v613, 120
          %v619 = vpop.permute.xlu0 %618
          %s621 = scalar_lea.vmem [#allocation2], 4
          %622 = vst.msk [vmem:[%s621] sm:$0xf] %vm609, %v619
          %623 = vrot.lane.b32.xlu0 %v613, 88
          %v624 = vpop.permute.xlu0 %623
          %s626 = scalar_lea.vmem [#allocation3], 4
          %627 = vst.msk [vmem:[%s626] sm:$0xf] %vm609, %v624
          %628 = vrot.lane.b32.xlu0 %v613, 112
          %v629 = vpop.permute.xlu0 %628
          %s631 = scalar_lea.vmem [#allocation2], 8
          %632 = vst.msk [vmem:[%s631] sm:$0xf] %vm609, %v629
          %633 = vrot.lane.b32.xlu0 %v613, 80
          %v634 = vpop.permute.xlu0 %633
          %s636 = scalar_lea.vmem [#allocation3], 8
          %637 = vst.msk [vmem:[%s636] sm:$0xf] %vm609, %v634
          %638 = vrot.lane.b32.xlu0 %v613, 104
          %v639 = vpop.permute.xlu0 %638
          %s641 = scalar_lea.vmem [#allocation2], 12
          %642 = vst.msk [vmem:[%s641] sm:$0xf] %vm609, %v639
          %643 = vrot.lane.b32.xlu0 %v613, 72
          %v644 = vpop.permute.xlu0 %643
          %s646 = scalar_lea.vmem [#allocation3], 12
          %647 = vst.msk [vmem:[%s646] sm:$0xf] %vm609, %v644
        $region84: #{tpu_custom_call.1} parent=79 // pred_fallthru
          _
        %s648 = smul.u32 %s34, 8
        %s649 = scalar_lea.vmem %s503, %s648
        %v650 = vld [vmem:[%s649] sm:$0xff]
        %vm651 = vcmask 261120
        %v652 = vsel %vm651, %v650, 0.0
        %653 = vadd.xlane.f32.xlu0 %v652
        %v654 = vpop.xlane.xlu0 %653
        %v655 = vrcp.pop 32.0
        %v656 = vmul.f32 %v654, %v655
        %v657 = vsub.f32 %v650, %v656
        %v658 = vmul.f32 %v657, %v657
        %v659 = vsel %vm651, %v658, 0.0
        %660 = vadd.xlane.f32.xlu0 %v659
        %v661 = vpop.xlane.xlu0 %660
        %v662 = vmul.f32 %v661, %v655
        %v663 = vadd.f32 %v662, 1e-05
        %v664 = vrsqrt.pop %v663
        %v665 = vmul.f32 %v657, %v664
        %v667 = vlaneseq
        %v668 = vshrl.u32 %v667, 7
        %v669 = vsub.s32 0, %v668
        %v670 = vrot.slane %v505, %v669
        %v672 = vmul.f32 %v665, %v670
        %v674 = vlaneseq
        %v675 = vshrl.u32 %v674, 7
        %v676 = vsub.s32 0, %v675
        %v677 = vrot.slane %v506, %v676
        %v679 = vadd.f32 %v672, %v677
        %v680 = vpack.c.bf16 %v679, %v679
        %v681 = vld [vmem:[%s3] sm:$0xf]
        %v682 = vld [vmem:[%s3 + $0x4] sm:$0xf]
        %v683 = vld [vmem:[%s3 + $0x8] sm:$0xf]
        %v684 = vld [vmem:[%s3 + $0xc] sm:$0xf]
        %v685 = vld [vmem:[%s4] sm:$0x1]
        %v687 = vlaneseq
        %v688 = vshrl.u32 %v687, 7
        %v689 = vsub.s32 0, %v688
        %v690 = vrot.slane %v685, %v689
        %v696 = vunpack.c.l.b16 %v681
        %v697 = vunpack.c.l.b16 %v682
        %v698 = vunpack.c.l.b16 %v683
        %v699 = vunpack.c.l.b16 %v684
        %v700 = vpack.c.b16 %v697, %v696
        %v701 = vpack.c.b16 %v699, %v698
        %v705 = vsel %vm651, %v680, 0
        %707 = vmatprep.subr.bf16.mxu0 0
        %708 = vmatpush1.bf16.msra.mxu0 %v700
        %709 = vmatprep.subr.bf16.mxu0 0
        %710 = vmatpush1.bf16.msra.mxu0 %v701
        %711 = vmatprep.subr.bf16.mxu0 0
        %712 = vmatpush1.bf16.msra.mxu0 0
        %713 = vmatprep.subr.bf16.mxu0 0
        %714 = vmatpush1.bf16.msra.mxu0 0
        %715 = vmatprep.subr.bf16.mxu0 0
        %716 = vmatpush1.bf16.msra.mxu0 0
        %717 = vmatprep.subr.bf16.mxu0 0
        %718 = vmatpush1.bf16.msra.mxu0 0
        %719 = vmatprep.subr.bf16.mxu0 0
        %720 = vmatpush1.bf16.msra.mxu0 0
        %721 = vmatprep.subr.bf16.mxu0 0
        %722 = vmatpush1.bf16.msra.mxu0 0
        %723 = vmatprep.subr.bf16.mxu0 0
        %724 = vmatpush1.bf16.msra.mxu0 0
        %725 = vmatprep.subr.bf16.mxu0 0
        %726 = vmatpush1.bf16.msra.mxu0 0
        %727 = vmatprep.subr.bf16.mxu0 0
        %728 = vmatpush1.bf16.msra.mxu0 0
        %729 = vmatprep.subr.bf16.mxu0 0
        %730 = vmatpush1.bf16.msra.mxu0 0
        %731 = vmatprep.subr.bf16.mxu0 0
        %732 = vmatpush1.bf16.msra.mxu0 0
        %733 = vmatprep.subr.bf16.mxu0 0
        %734 = vmatpush1.bf16.msra.mxu0 0
        %735 = vmatprep.subr.bf16.mxu0 0
        %736 = vmatpush1.bf16.msra.mxu0 0
        %737 = vmatprep.subr.bf16.mxu0 0
        %738 = vmatpush1.bf16.msra.mxu0 0
        %739 = vmatprep.mubr.bf16.mxu0 0
        %740 = vmatmul.mubr.bf16.gmra.mrb[0].mxu0 %v705
        %v741 = vpop.f32.mrb[0].mxu0
        %v742 = vadd.f32 %v690, %v741
        %v743 = vpop.f32.mrb[0].mxu0
        %v744 = vpop.f32.mrb[0].mxu0
        %v745 = vpop.f32.mrb[0].mxu0
        %746 = vdwg.mxu0
        %v747 = vmul.f32 %v742, 0.35355338
        %v748 = vlaneseq
        %v749 = vshrl.u32 %v748, 7
        %v750 = vlaneseq
        %v751 = vand.u32 %v750, 127
        %vm752 = vcmp.ge.s32.totalorder %v749, %v751
        %v753 = vpack.c.bf16 %v747, %v747
        %vm754 = vcmask 7168
        %755 = vst.msk [vmem:[#allocation4] sm:$0xff] %vm754, -1e+30
        %756 = vst.msk [vmem:[#allocation5] sm:$0xff] %vm754, 0.0
        %vm757 = vcmask 64512
        %758 = vst.msk [vmem:[#allocation6] sm:$0xff] %vm757, 0.0
        %s759 = sadd.s32 %s34, 1
        // While loop
        $region85: #{tpu_custom_call.1} parent=79 // loop_pre_header
          _
        $region86: #{tpu_custom_call.1} parent=79 // loop_header
          %s761 = sphi 0, %s763
          %p762 = scmp.ge.s32.totalorder %s761, %s759
        $region87: #{tpu_custom_call.1} parent=79 // loop_header_branch
          %765 = sbr.rel (%p762) target = $region91
        $region88: #{tpu_custom_call.1} parent=79 // loop_body
          %s766 = smul.u32 %s761, 8
          %s767 = sshra.s32 %s766, 3
          %s768 = sand.u32 %s766, 7
          %s769 = smul.addr %s767, 4
          %s770 = scalar_lea.vmem [#allocation2], %s769
          %v771 = vld [vmem:[%s770] sm:$0xf]
          %s772 = smul.addr %s767, 4
          %s773 = scalar_lea.vmem [#allocation3], %s772
          %v774 = vld [vmem:[%s773] sm:$0xf]
          %v776 = vsel %vm757, %v753, 0
          %v779 = vsel %vm757, %v771, 0
          %781 = vmatprep.subr.bf16.mxu0 0
          %782 = vmatpush1.bf16.xpose.msra.mxu0 %v779
          %783 = vmatprep.subr.bf16.mxu0 0
          %784 = vmatpush1.bf16.xpose.msra.mxu0 0
          %785 = vmatprep.subr.bf16.mxu0 0
          %786 = vmatpush1.bf16.xpose.msra.mxu0 0
          %787 = vmatprep.subr.bf16.mxu0 0
          %788 = vmatpush1.bf16.xpose.msra.mxu0 0
          %789 = vmatprep.subr.bf16.mxu0 0
          %790 = vmatpush1.bf16.xpose.msra.mxu0 0
          %791 = vmatprep.subr.bf16.mxu0 0
          %792 = vmatpush1.bf16.xpose.msra.mxu0 0
          %793 = vmatprep.subr.bf16.mxu0 0
          %794 = vmatpush1.bf16.xpose.msra.mxu0 0
          %795 = vmatprep.subr.bf16.mxu0 0
          %796 = vmatpush1.bf16.xpose.msra.mxu0 0
          %797 = vmatprep.subr.bf16.mxu0 0
          %798 = vmatpush1.bf16.xpose.msra.mxu0 0
          %799 = vmatprep.subr.bf16.mxu0 0
          %800 = vmatpush1.bf16.xpose.msra.mxu0 0
          %801 = vmatprep.subr.bf16.mxu0 0
          %802 = vmatpush1.bf16.xpose.msra.mxu0 0
          %803 = vmatprep.subr.bf16.mxu0 0
          %804 = vmatpush1.bf16.xpose.msra.mxu0 0
          %805 = vmatprep.subr.bf16.mxu0 0
          %806 = vmatpush1.bf16.xpose.msra.mxu0 0
          %807 = vmatprep.subr.bf16.mxu0 0
          %808 = vmatpush1.bf16.xpose.msra.mxu0 0
          %809 = vmatprep.subr.bf16.mxu0 0
          %810 = vmatpush1.bf16.xpose.msra.mxu0 0
          %811 = vmatprep.subr.bf16.mxu0 0
          %812 = vmatpush1.bf16.xpose.msra.mxu0 0
          %813 = vmatprep.mubr.bf16.mxu0 0
          %814 = vmatmul.mubr.bf16.gmra.mrb[0].mxu0 %v776
          %v815 = vpop.f32.mrb[0].mxu0
          %v816 = vadd.f32 0.0, %v815
          %v817 = vpop.f32.mrb[0].mxu0
          %v818 = vpop.f32.mrb[0].mxu0
          %v819 = vpop.f32.mrb[0].mxu0
          %820 = vdwg.mxu0
          %p821 = scmp.lt.s32.totalorder %s761, %s34
          %s822 = scalar_select %p821, 1, 0
          %v823 = vstv %s822
          %vm824 = vcmp.eq.s32.totalorder %v823, 1
          %vm825 = vmor %vm824, %vm752
          %v826 = vsel %vm825, %v816, -1e+30
          %v827 = vld [vmem:[#allocation4] sm:$0xff]
          %v828 = vsel %vm757, %v826, -inf
          %829 = vmax.xlane.f32.xlu0 %v828
          %v830 = vpop.xlane.xlu0 %829
          %v831 = vmax.f32 %v827, %v830
          %v832 = vsub.f32 %v827, %v831
          %v833 = vmul.f32 %v832, 1.442695
          %v834 = vpow.pop %v833
          %836 = vset.pattern.permute.xlu0 0
          %837 = vperm.xlu0 %836, %v831
          %v838 = vpop.permute.xlu0 %837
          %v840 = vsub.f32 %v826, %v838
          %v841 = vmul.f32 %v840, 1.442695
          %v842 = vpow.pop %v841
          %v843 = vld [vmem:[#allocation5] sm:$0xff]
          %v844 = vmul.f32 %v834, %v843
          %v845 = vsel %vm757, %v842, 0.0
          %846 = vadd.xlane.f32.xlu0 %v845
          %v847 = vpop.xlane.xlu0 %846
          %v848 = vadd.f32 %v844, %v847
          %849 = vst.msk [vmem:[#allocation5] sm:$0xff] %vm754, %v848
          %v850 = vld [vmem:[#allocation6] sm:$0xff]
          %852 = vset.pattern.permute.xlu0 0
          %853 = vperm.xlu0 %852, %v834
          %v854 = vpop.permute.xlu0 %853
          %v856 = vmul.f32 %v854, %v850
          %v857 = vpack.c.bf16 %v842, %v842
          %v859 = vsel %vm757, %v857, 0
          %vm861 = vcmask 1043456
          %v863 = vsel %vm861, %v774, 0
          %865 = vmatprep.subr.bf16.mxu0 0
          %866 = vmatpush1.bf16.msra.mxu0 %v863
          %867 = vmatprep.subr.bf16.mxu0 0
          %868 = vmatpush1.bf16.msra.mxu0 0
          %869 = vmatprep.subr.bf16.mxu0 0
          %870 = vmatpush1.bf16.msra.mxu0 0
          %871 = vmatprep.subr.bf16.mxu0 0
          %872 = vmatpush1.bf16.msra.mxu0 0
          %873 = vmatprep.subr.bf16.mxu0 0
          %874 = vmatpush1.bf16.msra.mxu0 0
          %875 = vmatprep.subr.bf16.mxu0 0
          %876 = vmatpush1.bf16.msra.mxu0 0
          %877 = vmatprep.subr.bf16.mxu0 0
          %878 = vmatpush1.bf16.msra.mxu0 0
          %879 = vmatprep.subr.bf16.mxu0 0
          %880 = vmatpush1.bf16.msra.mxu0 0
          %881 = vmatprep.subr.bf16.mxu0 0
          %882 = vmatpush1.bf16.msra.mxu0 0
          %883 = vmatprep.subr.bf16.mxu0 0
          %884 = vmatpush1.bf16.msra.mxu0 0
          %885 = vmatprep.subr.bf16.mxu0 0
          %886 = vmatpush1.bf16.msra.mxu0 0
          %887 = vmatprep.subr.bf16.mxu0 0
          %888 = vmatpush1.bf16.msra.mxu0 0
          %889 = vmatprep.subr.bf16.mxu0 0
          %890 = vmatpush1.bf16.msra.mxu0 0
          %891 = vmatprep.subr.bf16.mxu0 0
          %892 = vmatpush1.bf16.msra.mxu0 0
          %893 = vmatprep.subr.bf16.mxu0 0
          %894 = vmatpush1.bf16.msra.mxu0 0
          %895 = vmatprep.subr.bf16.mxu0 0
          %896 = vmatpush1.bf16.msra.mxu0 0
          %897 = vmatprep.mubr.bf16.mxu0 0
          %898 = vmatmul.mubr.bf16.gmra.mrb[0].mxu0 %v859
          %v899 = vpop.f32.mrb[0].mxu0
          %v900 = vadd.f32 0.0, %v899
          %v901 = vpop.f32.mrb[0].mxu0
          %v902 = vpop.f32.mrb[0].mxu0
          %v903 = vpop.f32.mrb[0].mxu0
          %904 = vdwg.mxu0
          %v905 = vadd.f32 %v856, %v900
          %906 = vst.msk [vmem:[#allocation6] sm:$0xff] %vm757, %v905
          %907 = vst.msk [vmem:[#allocation4] sm:$0xff] %vm754, %v831
        $region89: #{tpu_custom_call.1} parent=79 // loop_footer
          %s763 = sadd.s32 %s761, 1
        $region90: #{tpu_custom_call.1} parent=79 // loop_footer_branch
          %760 = sbr.rel target = $region86
        $region91: #{tpu_custom_call.1} parent=79 // loop_exit
          _
        %v908 = vld [vmem:[#allocation6] sm:$0xff]
        %v909 = vld [vmem:[#allocation5] sm:$0xff]
        %v910 = vrcp.pop %v909
        %912 = vset.pattern.permute.xlu0 0
        %913 = vperm.xlu0 %912, %v910
        %v914 = vpop.permute.xlu0 %913
        %v916 = vmul.f32 %v908, %v914
        %v917 = vpack.c.bf16 %v916, %v916
        %v918 = vld [vmem:[%s7] sm:$0xf]
        %919 = vst.msk [vmem:[#allocation4] sm:$0xff] %vm754, -1e+30
        %920 = vst.msk [vmem:[#allocation5] sm:$0xff] %vm754, 0.0
        %921 = vst.msk [vmem:[#allocation6] sm:$0xff] %vm757, 0.0
        // While loop
        $region92: #{tpu_custom_call.1} parent=79 // loop_pre_header
          _
        $region93: #{tpu_custom_call.1} parent=79 // loop_header
          %s923 = sphi 0, %s925
          %p924 = scmp.ge.s32.totalorder %s923, %s759
        $region94: #{tpu_custom_call.1} parent=79 // loop_header_branch
          %927 = sbr.rel (%p924) target = $region98
        $region95: #{tpu_custom_call.1} parent=79 // loop_body
          %s928 = smul.u32 %s923, 8
          %s929 = sshra.s32 %s928, 3
          %s930 = sand.u32 %s928, 7
          %s931 = sadd.s32 %s929, 1
          %s932 = smul.addr %s931, 4
          %s933 = scalar_lea.vmem [#allocation2], %s932
          %v934 = vld [vmem:[%s933] sm:$0xf]
          %s935 = smul.addr %s931, 4
          %s936 = scalar_lea.vmem [#allocation3], %s935
          %v937 = vld [vmem:[%s936] sm:$0xf]
          %939 = vrot.lane.b32.xlu0 %v753, 120
          %v940 = vpop.permute.xlu0 %939
          %v942 = vsel %vm757, %v940, 0
          %v945 = vsel %vm757, %v934, 0
          %947 = vmatprep.subr.bf16.mxu0 0
          %948 = vmatpush1.bf16.xpose.msra.mxu0 %v945
          %949 = vmatprep.subr.bf16.mxu0 0
          %950 = vmatpush1.bf16.xpose.msra.mxu0 0
          %951 = vmatprep.subr.bf16.mxu0 0
          %952 = vmatpush1.bf16.xpose.msra.mxu0 0
          %953 = vmatprep.subr.bf16.mxu0 0
          %954 = vmatpush1.bf16.xpose.msra.mxu0 0
          %955 = vmatprep.subr.bf16.mxu0 0
          %956 = vmatpush1.bf16.xpose.msra.mxu0 0
          %957 = vmatprep.subr.bf16.mxu0 0
          %958 = vmatpush1.bf16.xpose.msra.mxu0 0
          %959 = vmatprep.subr.bf16.mxu0 0
          %960 = vmatpush1.bf16.xpose.msra.mxu0 0
          %961 = vmatprep.subr.bf16.mxu0 0
          %962 = vmatpush1.bf16.xpose.msra.mxu0 0
          %963 = vmatprep.subr.bf16.mxu0 0
          %964 = vmatpush1.bf16.xpose.msra.mxu0 0
          %965 = vmatprep.subr.bf16.mxu0 0
          %966 = vmatpush1.bf16.xpose.msra.mxu0 0
          %967 = vmatprep.subr.bf16.mxu0 0
          %968 = vmatpush1.bf16.xpose.msra.mxu0 0
          %969 = vmatprep.subr.bf16.mxu0 0
          %970 = vmatpush1.bf16.xpose.msra.mxu0 0
          %971 = vmatprep.subr.bf16.mxu0 0
          %972 = vmatpush1.bf16.xpose.msra.mxu0 0
          %973 = vmatprep.subr.bf16.mxu0 0
          %974 = vmatpush1.bf16.xpose.msra.mxu0 0
          %975 = vmatprep.subr.bf16.mxu0 0
          %976 = vmatpush1.bf16.xpose.msra.mxu0 0
          %977 = vmatprep.subr.bf16.mxu0 0
          %978 = vmatpush1.bf16.xpose.msra.mxu0 0
          %979 = vmatprep.mubr.bf16.mxu0 0
          %980 = vmatmul.mubr.bf16.gmra.mrb[0].mxu0 %v942
          %v981 = vpop.f32.mrb[0].mxu0
          %v982 = vadd.f32 0.0, %v981
          %v983 = vpop.f32.mrb[0].mxu0
          %v984 = vpop.f32.mrb[0].mxu0
          %v985 = vpop.f32.mrb[0].mxu0
          %986 = vdwg.mxu0
          %p987 = scmp.lt.s32.totalorder %s923, %s34
          %s988 = scalar_select %p987, 1, 0
          %v989 = vstv %s988
          %vm990 = vcmp.eq.s32.totalorder %v989, 1
          %vm991 = vmor %vm990, %vm752
          %v992 = vsel %vm991, %v982, -1e+30
          %v993 = vld [vmem:[#allocation4] sm:$0xff]
          %v994 = vsel %vm757, %v992, -inf
          %995 = vmax.xlane.f32.xlu0 %v994
          %v996 = vpop.xlane.xlu0 %995
          %v997 = vmax.f32 %v993, %v996
          %v998 = vsub.f32 %v993, %v997
          %v999 = vmul.f32 %v998, 1.442695
          %v1000 = vpow.pop %v999
          %1002 = vset.pattern.permute.xlu0 0
          %1003 = vperm.xlu0 %1002, %v997
          %v1004 = vpop.permute.xlu0 %1003
          %v1006 = vsub.f32 %v992, %v1004
          %v1007 = vmul.f32 %v1006, 1.442695
          %v1008 = vpow.pop %v1007
          %v1009 = vld [vmem:[#allocation5] sm:$0xff]
          %v1010 = vmul.f32 %v1000, %v1009
          %v1011 = vsel %vm757, %v1008, 0.0
          %1012 = vadd.xlane.f32.xlu0 %v1011
          %v1013 = vpop.xlane.xlu0 %1012
          %v1014 = vadd.f32 %v1010, %v1013
          %1015 = vst.msk [vmem:[#allocation5] sm:$0xff] %vm754, %v1014
          %v1016 = vld [vmem:[#allocation6] sm:$0xff]
          %1018 = vset.pattern.permute.xlu0 0
          %1019 = vperm.xlu0 %1018, %v1000
          %v1020 = vpop.permute.xlu0 %1019
          %v1022 = vmul.f32 %v1020, %v1016
          %v1023 = vpack.c.bf16 %v1008, %v1008
          %v1025 = vsel %vm757, %v1023, 0
          %vm1027 = vcmask 1043456
          %v1029 = vsel %vm1027, %v937, 0
          %1031 = vmatprep.subr.bf16.mxu0 0
          %1032 = vmatpush1.bf16.msra.mxu0 %v1029
          %1033 = vmatprep.subr.bf16.mxu0 0
          %1034 = vmatpush1.bf16.msra.mxu0 0
          %1035 = vmatprep.subr.bf16.mxu0 0
          %1036 = vmatpush1.bf16.msra.mxu0 0
          %1037 = vmatprep.subr.bf16.mxu0 0
          %1038 = vmatpush1.bf16.msra.mxu0 0
          %1039 = vmatprep.subr.bf16.mxu0 0
          %1040 = vmatpush1.bf16.msra.mxu0 0
          %1041 = vmatprep.subr.bf16.mxu0 0
          %1042 = vmatpush1.bf16.msra.mxu0 0
          %1043 = vmatprep.subr.bf16.mxu0 0
          %1044 = vmatpush1.bf16.msra.mxu0 0
          %1045 = vmatprep.subr.bf16.mxu0 0
          %1046 = vmatpush1.bf16.msra.mxu0 0
          %1047 = vmatprep.subr.bf16.mxu0 0
          %1048 = vmatpush1.bf16.msra.mxu0 0
          %1049 = vmatprep.subr.bf16.mxu0 0
          %1050 = vmatpush1.bf16.msra.mxu0 0
          %1051 = vmatprep.subr.bf16.mxu0 0
          %1052 = vmatpush1.bf16.msra.mxu0 0
          %1053 = vmatprep.subr.bf16.mxu0 0
          %1054 = vmatpush1.bf16.msra.mxu0 0
          %1055 = vmatprep.subr.bf16.mxu0 0
          %1056 = vmatpush1.bf16.msra.mxu0 0
          %1057 = vmatprep.subr.bf16.mxu0 0
          %1058 = vmatpush1.bf16.msra.mxu0 0
          %1059 = vmatprep.subr.bf16.mxu0 0
          %1060 = vmatpush1.bf16.msra.mxu0 0
          %1061 = vmatprep.subr.bf16.mxu0 0
          %1062 = vmatpush1.bf16.msra.mxu0 0
          %1063 = vmatprep.mubr.bf16.mxu0 0
          %1064 = vmatmul.mubr.bf16.gmra.mrb[0].mxu0 %v1025
          %v1065 = vpop.f32.mrb[0].mxu0
          %v1066 = vadd.f32 0.0, %v1065
          %v1067 = vpop.f32.mrb[0].mxu0
          %v1068 = vpop.f32.mrb[0].mxu0
          %v1069 = vpop.f32.mrb[0].mxu0
          %1070 = vdwg.mxu0
          %v1071 = vadd.f32 %v1022, %v1066
          %1072 = vst.msk [vmem:[#allocation6] sm:$0xff] %vm757, %v1071
          %1073 = vst.msk [vmem:[#allocation4] sm:$0xff] %vm754, %v997
        $region96: #{tpu_custom_call.1} parent=79 // loop_footer
          %s925 = sadd.s32 %s923, 1
        $region97: #{tpu_custom_call.1} parent=79 // loop_footer_branch
          %922 = sbr.rel target = $region93
        $region98: #{tpu_custom_call.1} parent=79 // loop_exit
          _
        %v1074 = vld [vmem:[#allocation6] sm:$0xff]
        %v1075 = vld [vmem:[#allocation5] sm:$0xff]
        %v1076 = vrcp.pop %v1075
        %1078 = vset.pattern.permute.xlu0 0
        %1079 = vperm.xlu0 %1078, %v1076
        %v1080 = vpop.permute.xlu0 %1079
        %v1082 = vmul.f32 %v1074, %v1080
        %v1083 = vpack.c.bf16 %v1082, %v1082
        %s1084 = scalar_lea.vmem %s7, 4
        %v1085 = vld [vmem:[%s1084] sm:$0xf]
        %v1087 = vsel %vm757, %v1083, 0
        %vm1089 = vcmask 1043456
        %v1091 = vsel %vm1089, %v1085, 0
        %1093 = vmatprep.subr.bf16.mxu0 0
        %1094 = vmatpush1.bf16.msra.mxu0 %v1091
        %1095 = vmatprep.subr.bf16.mxu0 0
        %1096 = vmatpush1.bf16.msra.mxu0 0
        %1097 = vmatprep.subr.bf16.mxu0 0
        %1098 = vmatpush1.bf16.msra.mxu0 0
        %1099 = vmatprep.subr.bf16.mxu0 0
        %1100 = vmatpush1.bf16.msra.mxu0 0
        %1101 = vmatprep.subr.bf16.mxu0 0
        %1102 = vmatpush1.bf16.msra.mxu0 0
        %1103 = vmatprep.subr.bf16.mxu0 0
        %1104 = vmatpush1.bf16.msra.mxu0 0
        %1105 = vmatprep.subr.bf16.mxu0 0
        %1106 = vmatpush1.bf16.msra.mxu0 0
        %1107 = vmatprep.subr.bf16.mxu0 0
        %1108 = vmatpush1.bf16.msra.mxu0 0
        %1109 = vmatprep.subr.bf16.mxu0 0
        %1110 = vmatpush1.bf16.msra.mxu0 0
        %1111 = vmatprep.subr.bf16.mxu0 0
        %1112 = vmatpush1.bf16.msra.mxu0 0
        %1113 = vmatprep.subr.bf16.mxu0 0
        %1114 = vmatpush1.bf16.msra.mxu0 0
        %1115 = vmatprep.subr.bf16.mxu0 0
        %1116 = vmatpush1.bf16.msra.mxu0 0
        %1117 = vmatprep.subr.bf16.mxu0 0
        %1118 = vmatpush1.bf16.msra.mxu0 0
        %1119 = vmatprep.subr.bf16.mxu0 0
        %1120 = vmatpush1.bf16.msra.mxu0 0
        %1121 = vmatprep.subr.bf16.mxu0 0
        %1122 = vmatpush1.bf16.msra.mxu0 0
        %1123 = vmatprep.subr.bf16.mxu0 0
        %1124 = vmatpush1.bf16.msra.mxu0 0
        %1125 = vmatprep.mubr.bf16.mxu0 0
        %1126 = vmatmul.mubr.bf16.gmra.mrb[0].mxu0 %v1087
        %v1127 = vpop.f32.mrb[0].mxu0
        %v1128 = vadd.f32 0.0, %v1127
        %v1129 = vpop.f32.mrb[0].mxu0
        %v1130 = vpop.f32.mrb[0].mxu0
        %v1131 = vpop.f32.mrb[0].mxu0
        %1132 = vdwg.mxu0
        %v1134 = vsel %vm757, %v917, 0
        %v1137 = vsel %vm1089, %v918, 0
        %1139 = vmatprep.subr.bf16.mxu0 0
        %1140 = vmatpush1.bf16.msra.mxu0 %v1137
        %1141 = vmatprep.subr.bf16.mxu0 0
        %1142 = vmatpush1.bf16.msra.mxu0 0
        %1143 = vmatprep.subr.bf16.mxu0 0
        %1144 = vmatpush1.bf16.msra.mxu0 0
        %1145 = vmatprep.subr.bf16.mxu0 0
        %1146 = vmatpush1.bf16.msra.mxu0 0
        %1147 = vmatprep.subr.bf16.mxu0 0
        %1148 = vmatpush1.bf16.msra.mxu0 0
        %1149 = vmatprep.subr.bf16.mxu0 0
        %1150 = vmatpush1.bf16.msra.mxu0 0
        %1151 = vmatprep.subr.bf16.mxu0 0
        %1152 = vmatpush1.bf16.msra.mxu0 0
        %1153 = vmatprep.subr.bf16.mxu0 0
        %1154 = vmatpush1.bf16.msra.mxu0 0
        %1155 = vmatprep.subr.bf16.mxu0 0
        %1156 = vmatpush1.bf16.msra.mxu0 0
        %1157 = vmatprep.subr.bf16.mxu0 0
        %1158 = vmatpush1.bf16.msra.mxu0 0
        %1159 = vmatprep.subr.bf16.mxu0 0
        %1160 = vmatpush1.bf16.msra.mxu0 0
        %1161 = vmatprep.subr.bf16.mxu0 0
        %1162 = vmatpush1.bf16.msra.mxu0 0
        %1163 = vmatprep.subr.bf16.mxu0 0
        %1164 = vmatpush1.bf16.msra.mxu0 0
        %1165 = vmatprep.subr.bf16.mxu0 0
        %1166 = vmatpush1.bf16.msra.mxu0 0
        %1167 = vmatprep.subr.bf16.mxu0 0
        %1168 = vmatpush1.bf16.msra.mxu0 0
        %1169 = vmatprep.subr.bf16.mxu0 0
        %1170 = vmatpush1.bf16.msra.mxu0 0
        %1171 = vmatprep.mubr.bf16.mxu0 0
        %1172 = vmatmul.mubr.bf16.gmra.mrb[0].mxu0 %v1134
        %v1173 = vpop.f32.mrb[0].mxu0
        %v1174 = vadd.f32 %v1128, %v1173
        %v1175 = vpop.f32.mrb[0].mxu0
        %v1176 = vpop.f32.mrb[0].mxu0
        %v1177 = vpop.f32.mrb[0].mxu0
        %1178 = vdwg.mxu0
        %1179 = vst.msk [vmem:[#allocation4] sm:$0xff] %vm754, -1e+30
        %1180 = vst.msk [vmem:[#allocation5] sm:$0xff] %vm754, 0.0
        %1181 = vst.msk [vmem:[#allocation6] sm:$0xff] %vm757, 0.0
        // While loop
        $region99: #{tpu_custom_call.1} parent=79 // loop_pre_header
          _
        $region100: #{tpu_custom_call.1} parent=79 // loop_header
          %s1183 = sphi 0, %s1185
          %p1184 = scmp.ge.s32.totalorder %s1183, %s759
        $region101: #{tpu_custom_call.1} parent=79 // loop_header_branch
          %1187 = sbr.rel (%p1184) target = $region105
        $region102: #{tpu_custom_call.1} parent=79 // loop_body
          %s1188 = smul.u32 %s1183, 8
          %s1189 = sshra.s32 %s1188, 3
          %s1190 = sand.u32 %s1188, 7
          %s1191 = sadd.s32 %s1189, 2
          %s1192 = smul.addr %s1191, 4
          %s1193 = scalar_lea.vmem [#allocation2], %s1192
          %v1194 = vld [vmem:[%s1193] sm:$0xf]
          %s1195 = smul.addr %s1191, 4
          %s1196 = scalar_lea.vmem [#allocation3], %s1195
          %v1197 = vld [vmem:[%s1196] sm:$0xf]
          %1199 = vrot.lane.b32.xlu0 %v753, 112
          %v1200 = vpop.permute.xlu0 %1199
          %v1202 = vsel %vm757, %v1200, 0
          %v1205 = vsel %vm757, %v1194, 0
          %1207 = vmatprep.subr.bf16.mxu0 0
          %1208 = vmatpush1.bf16.xpose.msra.mxu0 %v1205
          %1209 = vmatprep.subr.bf16.mxu0 0
          %1210 = vmatpush1.bf16.xpose.msra.mxu0 0
          %1211 = vmatprep.subr.bf16.mxu0 0
          %1212 = vmatpush1.bf16.xpose.msra.mxu0 0
          %1213 = vmatprep.subr.bf16.mxu0 0
          %1214 = vmatpush1.bf16.xpose.msra.mxu0 0
          %1215 = vmatprep.subr.bf16.mxu0 0
          %1216 = vmatpush1.bf16.xpose.msra.mxu0 0
          %1217 = vmatprep.subr.bf16.mxu0 0
          %1218 = vmatpush1.bf16.xpose.msra.mxu0 0
          %1219 = vmatprep.subr.bf16.mxu0 0
          %1220 = vmatpush1.bf16.xpose.msra.mxu0 0
          %1221 = vmatprep.subr.bf16.mxu0 0
          %1222 = vmatpush1.bf16.xpose.msra.mxu0 0
          %1223 = vmatprep.subr.bf16.mxu0 0
          %1224 = vmatpush1.bf16.xpose.msra.mxu0 0
          %1225 = vmatprep.subr.bf16.mxu0 0
          %1226 = vmatpush1.bf16.xpose.msra.mxu0 0
          %1227 = vmatprep.subr.bf16.mxu0 0
          %1228 = vmatpush1.bf16.xpose.msra.mxu0 0
          %1229 = vmatprep.subr.bf16.mxu0 0
          %1230 = vmatpush1.bf16.xpose.msra.mxu0 0
          %1231 = vmatprep.subr.bf16.mxu0 0
          %1232 = vmatpush1.bf16.xpose.msra.mxu0 0
          %1233 = vmatprep.subr.bf16.mxu0 0
          %1234 = vmatpush1.bf16.xpose.msra.mxu0 0
          %1235 = vmatprep.subr.bf16.mxu0 0
          %1236 = vmatpush1.bf16.xpose.msra.mxu0 0
          %1237 = vmatprep.subr.bf16.mxu0 0
          %1238 = vmatpush1.bf16.xpose.msra.mxu0 0
          %1239 = vmatprep.mubr.bf16.mxu0 0
          %1240 = vmatmul.mubr.bf16.gmra.mrb[0].mxu0 %v1202
          %v1241 = vpop.f32.mrb[0].mxu0
          %v1242 = vadd.f32 0.0, %v1241
          %v1243 = vpop.f32.mrb[0].mxu0
          %v1244 = vpop.f32.mrb[0].mxu0
          %v1245 = vpop.f32.mrb[0].mxu0
          %1246 = vdwg.mxu0
          %p1247 = scmp.lt.s32.totalorder %s1183, %s34
          %s1248 = scalar_select %p1247, 1, 0
          %v1249 = vstv %s1248
          %vm1250 = vcmp.eq.s32.totalorder %v1249, 1
          %vm1251 = vmor %vm1250, %vm752
          %v1252 = vsel %vm1251, %v1242, -1e+30
          %v1253 = vld [vmem:[#allocation4] sm:$0xff]
          %v1254 = vsel %vm757, %v1252, -inf
          %1255 = vmax.xlane.f32.xlu0 %v1254
          %v1256 = vpop.xlane.xlu0 %1255
          %v1257 = vmax.f32 %v1253, %v1256
          %v1258 = vsub.f32 %v1253, %v1257
          %v1259 = vmul.f32 %v1258, 1.442695
          %v1260 = vpow.pop %v1259
          %1262 = vset.pattern.permute.xlu0 0
          %1263 = vperm.xlu0 %1262, %v1257
          %v1264 = vpop.permute.xlu0 %1263
          %v1266 = vsub.f32 %v1252, %v1264
          %v1267 = vmul.f32 %v1266, 1.442695
          %v1268 = vpow.pop %v1267
          %v1269 = vld [vmem:[#allocation5] sm:$0xff]
          %v1270 = vmul.f32 %v1260, %v1269
          %v1271 = vsel %vm757, %v1268, 0.0
          %1272 = vadd.xlane.f32.xlu0 %v1271
          %v1273 = vpop.xlane.xlu0 %1272
          %v1274 = vadd.f32 %v1270, %v1273
          %1275 = vst.msk [vmem:[#allocation5] sm:$0xff] %vm754, %v1274
          %v1276 = vld [vmem:[#allocation6] sm:$0xff]
          %1278 = vset.pattern.permute.xlu0 0
          %1279 = vperm.xlu0 %1278, %v1260
          %v1280 = vpop.permute.xlu0 %1279
          %v1282 = vmul.f32 %v1280, %v1276
          %v1283 = vpack.c.bf16 %v1268, %v1268
          %v1285 = vsel %vm757, %v1283, 0
          %v1288 = vsel %vm1089, %v1197, 0
          %1290 = vmatprep.subr.bf16.mxu0 0
          %1291 = vmatpush1.bf16.msra.mxu0 %v1288
          %1292 = vmatprep.subr.bf16.mxu0 0
          %1293 = vmatpush1.bf16.msra.mxu0 0
          %1294 = vmatprep.subr.bf16.mxu0 0
          %1295 = vmatpush1.bf16.msra.mxu0 0
          %1296 = vmatprep.subr.bf16.mxu0 0
          %1297 = vmatpush1.bf16.msra.mxu0 0
          %1298 = vmatprep.subr.bf16.mxu0 0
          %1299 = vmatpush1.bf16.msra.mxu0 0
          %1300 = vmatprep.subr.bf16.mxu0 0
          %1301 = vmatpush1.bf16.msra.mxu0 0
          %1302 = vmatprep.subr.bf16.mxu0 0
          %1303 = vmatpush1.bf16.msra.mxu0 0
          %1304 = vmatprep.subr.bf16.mxu0 0
          %1305 = vmatpush1.bf16.msra.mxu0 0
          %1306 = vmatprep.subr.bf16.mxu0 0
          %1307 = vmatpush1.bf16.msra.mxu0 0
          %1308 = vmatprep.subr.bf16.mxu0 0
          %1309 = vmatpush1.bf16.msra.mxu0 0
          %1310 = vmatprep.subr.bf16.mxu0 0
          %1311 = vmatpush1.bf16.msra.mxu0 0
          %1312 = vmatprep.subr.bf16.mxu0 0
          %1313 = vmatpush1.bf16.msra.mxu0 0
          %1314 = vmatprep.subr.bf16.mxu0 0
          %1315 = vmatpush1.bf16.msra.mxu0 0
          %1316 = vmatprep.subr.bf16.mxu0 0
          %1317 = vmatpush1.bf16.msra.mxu0 0
          %1318 = vmatprep.subr.bf16.mxu0 0
          %1319 = vmatpush1.bf16.msra.mxu0 0
          %1320 = vmatprep.subr.bf16.mxu0 0
          %1321 = vmatpush1.bf16.msra.mxu0 0
          %1322 = vmatprep.mubr.bf16.mxu0 0
          %1323 = vmatmul.mubr.bf16.gmra.mrb[0].mxu0 %v1285
          %v1324 = vpop.f32.mrb[0].mxu0
          %v1325 = vadd.f32 0.0, %v1324
          %v1326 = vpop.f32.mrb[0].mxu0
          %v1327 = vpop.f32.mrb[0].mxu0
          %v1328 = vpop.f32.mrb[0].mxu0
          %1329 = vdwg.mxu0
          %v1330 = vadd.f32 %v1282, %v1325
          %1331 = vst.msk [vmem:[#allocation6] sm:$0xff] %vm757, %v1330
          %1332 = vst.msk [vmem:[#allocation4] sm:$0xff] %vm754, %v1257
        $region103: #{tpu_custom_call.1} parent=79 // loop_footer
          %s1185 = sadd.s32 %s1183, 1
        $region104: #{tpu_custom_call.1} parent=79 // loop_footer_branch
          %1182 = sbr.rel target = $region100
        $region105: #{tpu_custom_call.1} parent=79 // loop_exit
          _
        %v1333 = vld [vmem:[#allocation6] sm:$0xff]
        %v1334 = vld [vmem:[#allocation5] sm:$0xff]
        %v1335 = vrcp.pop %v1334
        %1337 = vset.pattern.permute.xlu0 0
        %1338 = vperm.xlu0 %1337, %v1335
        %v1339 = vpop.permute.xlu0 %1338
        %v1341 = vmul.f32 %v1333, %v1339
        %v1342 = vpack.c.bf16 %v1341, %v1341
        %s1343 = scalar_lea.vmem %s7, 8
        %v1344 = vld [vmem:[%s1343] sm:$0xf]
        %v1346 = vsel %vm757, %v1342, 0
        %v1349 = vsel %vm1089, %v1344, 0
        %1351 = vmatprep.subr.bf16.mxu0 0
        %1352 = vmatpush1.bf16.msra.mxu0 %v1349
        %1353 = vmatprep.subr.bf16.mxu0 0
        %1354 = vmatpush1.bf16.msra.mxu0 0
        %1355 = vmatprep.subr.bf16.mxu0 0
        %1356 = vmatpush1.bf16.msra.mxu0 0
        %1357 = vmatprep.subr.bf16.mxu0 0
        %1358 = vmatpush1.bf16.msra.mxu0 0
        %1359 = vmatprep.subr.bf16.mxu0 0
        %1360 = vmatpush1.bf16.msra.mxu0 0
        %1361 = vmatprep.subr.bf16.mxu0 0
        %1362 = vmatpush1.bf16.msra.mxu0 0
        %1363 = vmatprep.subr.bf16.mxu0 0
        %1364 = vmatpush1.bf16.msra.mxu0 0
        %1365 = vmatprep.subr.bf16.mxu0 0
        %1366 = vmatpush1.bf16.msra.mxu0 0
        %1367 = vmatprep.subr.bf16.mxu0 0
        %1368 = vmatpush1.bf16.msra.mxu0 0
        %1369 = vmatprep.subr.bf16.mxu0 0
        %1370 = vmatpush1.bf16.msra.mxu0 0
        %1371 = vmatprep.subr.bf16.mxu0 0
        %1372 = vmatpush1.bf16.msra.mxu0 0
        %1373 = vmatprep.subr.bf16.mxu0 0
        %1374 = vmatpush1.bf16.msra.mxu0 0
        %1375 = vmatprep.subr.bf16.mxu0 0
        %1376 = vmatpush1.bf16.msra.mxu0 0
        %1377 = vmatprep.subr.bf16.mxu0 0
        %1378 = vmatpush1.bf16.msra.mxu0 0
        %1379 = vmatprep.subr.bf16.mxu0 0
        %1380 = vmatpush1.bf16.msra.mxu0 0
        %1381 = vmatprep.subr.bf16.mxu0 0
        %1382 = vmatpush1.bf16.msra.mxu0 0
        %1383 = vmatprep.mubr.bf16.mxu0 0
        %1384 = vmatmul.mubr.bf16.gmra.mrb[0].mxu0 %v1346
        %v1385 = vpop.f32.mrb[0].mxu0
        %v1386 = vadd.f32 0.0, %v1385
        %v1387 = vpop.f32.mrb[0].mxu0
        %v1388 = vpop.f32.mrb[0].mxu0
        %v1389 = vpop.f32.mrb[0].mxu0
        %1390 = vdwg.mxu0
        %v1391 = vadd.f32 %v1174, %v1386
        %1392 = vst.msk [vmem:[#allocation4] sm:$0xff] %vm754, -1e+30
        %1393 = vst.msk [vmem:[#allocation5] sm:$0xff] %vm754, 0.0
        %1394 = vst.msk [vmem:[#allocation6] sm:$0xff] %vm757, 0.0
        // While loop
        $region106: #{tpu_custom_call.1} parent=79 // loop_pre_header
          _
        $region107: #{tpu_custom_call.1} parent=79 // loop_header
          %s1396 = sphi 0, %s1398
          %p1397 = scmp.ge.s32.totalorder %s1396, %s759
        $region108: #{tpu_custom_call.1} parent=79 // loop_header_branch
          %1400 = sbr.rel (%p1397) target = $region112
        $region109: #{tpu_custom_call.1} parent=79 // loop_body
          %s1401 = smul.u32 %s1396, 8
          %s1402 = sshra.s32 %s1401, 3
          %s1403 = sand.u32 %s1401, 7
          %s1404 = sadd.s32 %s1402, 3
          %s1405 = smul.addr %s1404, 4
          %s1406 = scalar_lea.vmem [#allocation2], %s1405
          %v1407 = vld [vmem:[%s1406] sm:$0xf]
          %s1408 = smul.addr %s1404, 4
          %s1409 = scalar_lea.vmem [#allocation3], %s1408
          %v1410 = vld [vmem:[%s1409] sm:$0xf]
          %1412 = vrot.lane.b32.xlu0 %v753, 104
          %v1413 = vpop.permute.xlu0 %1412
          %v1415 = vsel %vm757, %v1413, 0
          %v1418 = vsel %vm757, %v1407, 0
          %1420 = vmatprep.subr.bf16.mxu0 0
          %1421 = vmatpush1.bf16.xpose.msra.mxu0 %v1418
          %1422 = vmatprep.subr.bf16.mxu0 0
          %1423 = vmatpush1.bf16.xpose.msra.mxu0 0
          %1424 = vmatprep.subr.bf16.mxu0 0
          %1425 = vmatpush1.bf16.xpose.msra.mxu0 0
          %1426 = vmatprep.subr.bf16.mxu0 0
          %1427 = vmatpush1.bf16.xpose.msra.mxu0 0
          %1428 = vmatprep.subr.bf16.mxu0 0
          %1429 = vmatpush1.bf16.xpose.msra.mxu0 0
          %1430 = vmatprep.subr.bf16.mxu0 0
          %1431 = vmatpush1.bf16.xpose.msra.mxu0 0
          %1432 = vmatprep.subr.bf16.mxu0 0
          %1433 = vmatpush1.bf16.xpose.msra.mxu0 0
          %1434 = vmatprep.subr.bf16.mxu0 0
          %1435 = vmatpush1.bf16.xpose.msra.mxu0 0
          %1436 = vmatprep.subr.bf16.mxu0 0
          %1437 = vmatpush1.bf16.xpose.msra.mxu0 0
          %1438 = vmatprep.subr.bf16.mxu0 0
          %1439 = vmatpush1.bf16.xpose.msra.mxu0 0
          %1440 = vmatprep.subr.bf16.mxu0 0
          %1441 = vmatpush1.bf16.xpose.msra.mxu0 0
          %1442 = vmatprep.subr.bf16.mxu0 0
          %1443 = vmatpush1.bf16.xpose.msra.mxu0 0
          %1444 = vmatprep.subr.bf16.mxu0 0
          %1445 = vmatpush1.bf16.xpose.msra.mxu0 0
          %1446 = vmatprep.subr.bf16.mxu0 0
          %1447 = vmatpush1.bf16.xpose.msra.mxu0 0
          %1448 = vmatprep.subr.bf16.mxu0 0
          %1449 = vmatpush1.bf16.xpose.msra.mxu0 0
          %1450 = vmatprep.subr.bf16.mxu0 0
          %1451 = vmatpush1.bf16.xpose.msra.mxu0 0
          %1452 = vmatprep.mubr.bf16.mxu0 0
          %1453 = vmatmul.mubr.bf16.gmra.mrb[0].mxu0 %v1415
          %v1454 = vpop.f32.mrb[0].mxu0
          %v1455 = vadd.f32 0.0, %v1454
          %v1456 = vpop.f32.mrb[0].mxu0
          %v1457 = vpop.f32.mrb[0].mxu0
          %v1458 = vpop.f32.mrb[0].mxu0
          %1459 = vdwg.mxu0
          %p1460 = scmp.lt.s32.totalorder %s1396, %s34
          %s1461 = scalar_select %p1460, 1, 0
          %v1462 = vstv %s1461
          %vm1463 = vcmp.eq.s32.totalorder %v1462, 1
          %vm1464 = vmor %vm1463, %vm752
          %v1465 = vsel %vm1464, %v1455, -1e+30
          %v1466 = vld [vmem:[#allocation4] sm:$0xff]
          %v1467 = vsel %vm757, %v1465, -inf
          %1468 = vmax.xlane.f32.xlu0 %v1467
          %v1469 = vpop.xlane.xlu0 %1468
          %v1470 = vmax.f32 %v1466, %v1469
          %v1471 = vsub.f32 %v1466, %v1470
          %v1472 = vmul.f32 %v1471, 1.442695
          %v1473 = vpow.pop %v1472
          %1475 = vset.pattern.permute.xlu0 0
          %1476 = vperm.xlu0 %1475, %v1470
          %v1477 = vpop.permute.xlu0 %1476
          %v1479 = vsub.f32 %v1465, %v1477
          %v1480 = vmul.f32 %v1479, 1.442695
          %v1481 = vpow.pop %v1480
          %v1482 = vld [vmem:[#allocation5] sm:$0xff]
          %v1483 = vmul.f32 %v1473, %v1482
          %v1484 = vsel %vm757, %v1481, 0.0
          %1485 = vadd.xlane.f32.xlu0 %v1484
          %v1486 = vpop.xlane.xlu0 %1485
          %v1487 = vadd.f32 %v1483, %v1486
          %1488 = vst.msk [vmem:[#allocation5] sm:$0xff] %vm754, %v1487
          %v1489 = vld [vmem:[#allocation6] sm:$0xff]
          %1491 = vset.pattern.permute.xlu0 0
          %1492 = vperm.xlu0 %1491, %v1473
          %v1493 = vpop.permute.xlu0 %1492
          %v1495 = vmul.f32 %v1493, %v1489
          %v1496 = vpack.c.bf16 %v1481, %v1481
          %v1498 = vsel %vm757, %v1496, 0
          %v1501 = vsel %vm1089, %v1410, 0
          %1503 = vmatprep.subr.bf16.mxu0 0
          %1504 = vmatpush1.bf16.msra.mxu0 %v1501
          %1505 = vmatprep.subr.bf16.mxu0 0
          %1506 = vmatpush1.bf16.msra.mxu0 0
          %1507 = vmatprep.subr.bf16.mxu0 0
          %1508 = vmatpush1.bf16.msra.mxu0 0
          %1509 = vmatprep.subr.bf16.mxu0 0
          %1510 = vmatpush1.bf16.msra.mxu0 0
          %1511 = vmatprep.subr.bf16.mxu0 0
          %1512 = vmatpush1.bf16.msra.mxu0 0
          %1513 = vmatprep.subr.bf16.mxu0 0
          %1514 = vmatpush1.bf16.msra.mxu0 0
          %1515 = vmatprep.subr.bf16.mxu0 0
          %1516 = vmatpush1.bf16.msra.mxu0 0
          %1517 = vmatprep.subr.bf16.mxu0 0
          %1518 = vmatpush1.bf16.msra.mxu0 0
          %1519 = vmatprep.subr.bf16.mxu0 0
          %1520 = vmatpush1.bf16.msra.mxu0 0
          %1521 = vmatprep.subr.bf16.mxu0 0
          %1522 = vmatpush1.bf16.msra.mxu0 0
          %1523 = vmatprep.subr.bf16.mxu0 0
          %1524 = vmatpush1.bf16.msra.mxu0 0
          %1525 = vmatprep.subr.bf16.mxu0 0
          %1526 = vmatpush1.bf16.msra.mxu0 0
          %1527 = vmatprep.subr.bf16.mxu0 0
          %1528 = vmatpush1.bf16.msra.mxu0 0
          %1529 = vmatprep.subr.bf16.mxu0 0
          %1530 = vmatpush1.bf16.msra.mxu0 0
          %1531 = vmatprep.subr.bf16.mxu0 0
          %1532 = vmatpush1.bf16.msra.mxu0 0
          %1533 = vmatprep.subr.bf16.mxu0 0
          %1534 = vmatpush1.bf16.msra.mxu0 0
          %1535 = vmatprep.mubr.bf16.mxu0 0
          %1536 = vmatmul.mubr.bf16.gmra.mrb[0].mxu0 %v1498
          %v1537 = vpop.f32.mrb[0].mxu0
          %v1538 = vadd.f32 0.0, %v1537
          %v1539 = vpop.f32.mrb[0].mxu0
          %v1540 = vpop.f32.mrb[0].mxu0
          %v1541 = vpop.f32.mrb[0].mxu0
          %1542 = vdwg.mxu0
          %v1543 = vadd.f32 %v1495, %v1538
          %1544 = vst.msk [vmem:[#allocation6] sm:$0xff] %vm757, %v1543
          %1545 = vst.msk [vmem:[#allocation4] sm:$0xff] %vm754, %v1470
        $region110: #{tpu_custom_call.1} parent=79 // loop_footer
          %s1398 = sadd.s32 %s1396, 1
        $region111: #{tpu_custom_call.1} parent=79 // loop_footer_branch
          %1395 = sbr.rel target = $region107
        $region112: #{tpu_custom_call.1} parent=79 // loop_exit
          _
        %v1546 = vld [vmem:[#allocation6] sm:$0xff]
        %v1547 = vld [vmem:[#allocation5] sm:$0xff]
        %v1548 = vrcp.pop %v1547
        %1550 = vset.pattern.permute.xlu0 0
        %1551 = vperm.xlu0 %1550, %v1548
        %v1552 = vpop.permute.xlu0 %1551
        %v1554 = vmul.f32 %v1546, %v1552
        %v1555 = vpack.c.bf16 %v1554, %v1554
        %s1556 = scalar_lea.vmem %s7, 12
        %v1557 = vld [vmem:[%s1556] sm:$0xf]
        %v1559 = vsel %vm757, %v1555, 0
        %v1562 = vsel %vm1089, %v1557, 0
        %1564 = vmatprep.subr.bf16.mxu0 0
        %1565 = vmatpush1.bf16.msra.mxu0 %v1562
        %1566 = vmatprep.subr.bf16.mxu0 0
        %1567 = vmatpush1.bf16.msra.mxu0 0
        %1568 = vmatprep.subr.bf16.mxu0 0
        %1569 = vmatpush1.bf16.msra.mxu0 0
        %1570 = vmatprep.subr.bf16.mxu0 0
        %1571 = vmatpush1.bf16.msra.mxu0 0
        %1572 = vmatprep.subr.bf16.mxu0 0
        %1573 = vmatpush1.bf16.msra.mxu0 0
        %1574 = vmatprep.subr.bf16.mxu0 0
        %1575 = vmatpush1.bf16.msra.mxu0 0
        %1576 = vmatprep.subr.bf16.mxu0 0
        %1577 = vmatpush1.bf16.msra.mxu0 0
        %1578 = vmatprep.subr.bf16.mxu0 0
        %1579 = vmatpush1.bf16.msra.mxu0 0
        %1580 = vmatprep.subr.bf16.mxu0 0
        %1581 = vmatpush1.bf16.msra.mxu0 0
        %1582 = vmatprep.subr.bf16.mxu0 0
        %1583 = vmatpush1.bf16.msra.mxu0 0
        %1584 = vmatprep.subr.bf16.mxu0 0
        %1585 = vmatpush1.bf16.msra.mxu0 0
        %1586 = vmatprep.subr.bf16.mxu0 0
        %1587 = vmatpush1.bf16.msra.mxu0 0
        %1588 = vmatprep.subr.bf16.mxu0 0
        %1589 = vmatpush1.bf16.msra.mxu0 0
        %1590 = vmatprep.subr.bf16.mxu0 0
        %1591 = vmatpush1.bf16.msra.mxu0 0
        %1592 = vmatprep.subr.bf16.mxu0 0
        %1593 = vmatpush1.bf16.msra.mxu0 0
        %1594 = vmatprep.subr.bf16.mxu0 0
        %1595 = vmatpush1.bf16.msra.mxu0 0
        %1596 = vmatprep.mubr.bf16.mxu0 0
        %1597 = vmatmul.mubr.bf16.gmra.mrb[0].mxu0 %v1559
        %v1598 = vpop.f32.mrb[0].mxu0
        %v1599 = vadd.f32 0.0, %v1598
        %v1600 = vpop.f32.mrb[0].mxu0
        %v1601 = vpop.f32.mrb[0].mxu0
        %v1602 = vpop.f32.mrb[0].mxu0
        %1603 = vdwg.mxu0
        %v1604 = vadd.f32 %v1391, %v1599
        %v1605 = vadd.f32 %v650, %v1604
        %v1606 = vld [vmem:[%s8] sm:$0x1]
        %v1608 = vlaneseq
        %v1609 = vshrl.u32 %v1608, 7
        %v1610 = vsub.s32 0, %v1609
        %v1611 = vrot.slane %v1606, %v1610
        %v1613 = vadd.f32 %v1605, %v1611
        %v1614 = vld [vmem:[%s9] sm:$0x1]
        %v1615 = vld [vmem:[%s10] sm:$0x1]
        %v1616 = vsel %vm651, %v1613, 0.0
        %1617 = vadd.xlane.f32.xlu0 %v1616
        %v1618 = vpop.xlane.xlu0 %1617
        %v1619 = vmul.f32 %v1618, %v655
        %v1620 = vsub.f32 %v1613, %v1619
        %v1621 = vmul.f32 %v1620, %v1620
        %v1622 = vsel %vm651, %v1621, 0.0
        %1623 = vadd.xlane.f32.xlu0 %v1622
        %v1624 = vpop.xlane.xlu0 %1623
        %v1625 = vmul.f32 %v1624, %v655
        %v1626 = vadd.f32 %v1625, 1e-05
        %v1627 = vrsqrt.pop %v1626
        %v1628 = vmul.f32 %v1620, %v1627
        %v1630 = vlaneseq
        %v1631 = vshrl.u32 %v1630, 7
        %v1632 = vsub.s32 0, %v1631
        %v1633 = vrot.slane %v1614, %v1632
        %v1635 = vmul.f32 %v1628, %v1633
        %v1637 = vlaneseq
        %v1638 = vshrl.u32 %v1637, 7
        %v1639 = vsub.s32 0, %v1638
        %v1640 = vrot.slane %v1615, %v1639
        %v1642 = vadd.f32 %v1635, %v1640
        %v1643 = vpack.c.bf16 %v1642, %v1642
        %v1644 = vld [vmem:[%s11] sm:$0xf]
        %v1645 = vld [vmem:[%s11 + $0x4] sm:$0xf]
        %v1646 = vld [vmem:[%s11 + $0x8] sm:$0xf]
        %v1647 = vld [vmem:[%s11 + $0xc] sm:$0xf]
        %v1648 = vld [vmem:[%s12] sm:$0x1]
        %v1650 = vlaneseq
        %v1651 = vshrl.u32 %v1650, 7
        %v1652 = vsub.s32 0, %v1651
        %v1653 = vrot.slane %v1648, %v1652
        %v1659 = vunpack.c.l.b16 %v1644
        %v1660 = vunpack.c.l.b16 %v1645
        %v1661 = vunpack.c.l.b16 %v1646
        %v1662 = vunpack.c.l.b16 %v1647
        %v1663 = vpack.c.b16 %v1660, %v1659
        %v1664 = vpack.c.b16 %v1662, %v1661
        %v1668 = vsel %vm651, %v1643, 0
        %1670 = vmatprep.subr.bf16.mxu0 0
        %1671 = vmatpush1.bf16.msra.mxu0 %v1663
        %1672 = vmatprep.subr.bf16.mxu0 0
        %1673 = vmatpush1.bf16.msra.mxu0 %v1664
        %1674 = vmatprep.subr.bf16.mxu0 0
        %1675 = vmatpush1.bf16.msra.mxu0 0
        %1676 = vmatprep.subr.bf16.mxu0 0
        %1677 = vmatpush1.bf16.msra.mxu0 0
        %1678 = vmatprep.subr.bf16.mxu0 0
        %1679 = vmatpush1.bf16.msra.mxu0 0
        %1680 = vmatprep.subr.bf16.mxu0 0
        %1681 = vmatpush1.bf16.msra.mxu0 0
        %1682 = vmatprep.subr.bf16.mxu0 0
        %1683 = vmatpush1.bf16.msra.mxu0 0
        %1684 = vmatprep.subr.bf16.mxu0 0
        %1685 = vmatpush1.bf16.msra.mxu0 0
        %1686 = vmatprep.subr.bf16.mxu0 0
        %1687 = vmatpush1.bf16.msra.mxu0 0
        %1688 = vmatprep.subr.bf16.mxu0 0
        %1689 = vmatpush1.bf16.msra.mxu0 0
        %1690 = vmatprep.subr.bf16.mxu0 0
        %1691 = vmatpush1.bf16.msra.mxu0 0
        %1692 = vmatprep.subr.bf16.mxu0 0
        %1693 = vmatpush1.bf16.msra.mxu0 0
        %1694 = vmatprep.subr.bf16.mxu0 0
        %1695 = vmatpush1.bf16.msra.mxu0 0
        %1696 = vmatprep.subr.bf16.mxu0 0
        %1697 = vmatpush1.bf16.msra.mxu0 0
        %1698 = vmatprep.subr.bf16.mxu0 0
        %1699 = vmatpush1.bf16.msra.mxu0 0
        %1700 = vmatprep.subr.bf16.mxu0 0
        %1701 = vmatpush1.bf16.msra.mxu0 0
        %1702 = vmatprep.mubr.bf16.mxu0 0
        %1703 = vmatmul.mubr.bf16.gmra.mrb[0].mxu0 %v1668
        %v1704 = vpop.f32.mrb[0].mxu0
        %v1705 = vadd.f32 %v1653, %v1704
        %v1706 = vpop.f32.mrb[0].mxu0
        %v1707 = vpop.f32.mrb[0].mxu0
        %v1708 = vpop.f32.mrb[0].mxu0
        %1709 = vdwg.mxu0
        %v1710 = vmul.f32 %v1705, 0.5
        %v1711 = vmul.f32 %v1705, 0.044715
        %v1712 = vmul.f32 %v1711, %v1705
        %v1713 = vmul.f32 %v1712, %v1705
        %v1714 = vadd.f32 %v1705, %v1713
        %v1715 = vmul.f32 %v1714, 0.7978846
        %v1716 = vtanh.pop %v1715
        %v1717 = vadd.f32 %v1716, 1.0
        %v1718 = vmul.f32 %v1710, %v1717
        %v1719 = vpack.c.bf16 %v1718, %v1718
        %v1720 = vld [vmem:[%s13] sm:$0xf]
        %v1721 = vld [vmem:[%s13 + $0x4] sm:$0xf]
        %v1722 = vld [vmem:[%s13 + $0x8] sm:$0xf]
        %v1723 = vld [vmem:[%s13 + $0xc] sm:$0xf]
        %v1724 = vld [vmem:[%s13 + $0x10] sm:$0xf]
        %v1725 = vld [vmem:[%s13 + $0x14] sm:$0xf]
        %v1726 = vld [vmem:[%s13 + $0x18] sm:$0xf]
        %v1727 = vld [vmem:[%s13 + $0x1c] sm:$0xf]
        %v1728 = vld [vmem:[%s13 + $0x20] sm:$0xf]
        %v1729 = vld [vmem:[%s13 + $0x24] sm:$0xf]
        %v1730 = vld [vmem:[%s13 + $0x28] sm:$0xf]
        %v1731 = vld [vmem:[%s13 + $0x2c] sm:$0xf]
        %v1732 = vld [vmem:[%s13 + $0x30] sm:$0xf]
        %v1733 = vld [vmem:[%s13 + $0x34] sm:$0xf]
        %v1734 = vld [vmem:[%s13 + $0x38] sm:$0xf]
        %v1735 = vld [vmem:[%s13 + $0x3c] sm:$0xf]
        %v1736 = vld [vmem:[%s14] sm:$0x1]
        %v1738 = vlaneseq
        %v1739 = vshrl.u32 %v1738, 7
        %v1740 = vsub.s32 0, %v1739
        %v1741 = vrot.slane %v1736, %v1740
        %v1759 = vunpack.c.l.b16 %v1720
        %v1760 = vunpack.c.l.b16 %v1721
        %v1761 = vunpack.c.l.b16 %v1722
        %v1762 = vunpack.c.l.b16 %v1723
        %v1763 = vunpack.c.l.b16 %v1724
        %v1764 = vunpack.c.l.b16 %v1725
        %v1765 = vunpack.c.l.b16 %v1726
        %v1766 = vunpack.c.l.b16 %v1727
        %v1767 = vunpack.c.l.b16 %v1728
        %v1768 = vunpack.c.l.b16 %v1729
        %v1769 = vunpack.c.l.b16 %v1730
        %v1770 = vunpack.c.l.b16 %v1731
        %v1771 = vunpack.c.l.b16 %v1732
        %v1772 = vunpack.c.l.b16 %v1733
        %v1773 = vunpack.c.l.b16 %v1734
        %v1774 = vunpack.c.l.b16 %v1735
        %v1775 = vpack.c.b16 %v1760, %v1759
        %v1776 = vpack.c.b16 %v1762, %v1761
        %v1777 = vpack.c.b16 %v1764, %v1763
        %v1778 = vpack.c.b16 %v1766, %v1765
        %v1779 = vpack.c.b16 %v1768, %v1767
        %v1780 = vpack.c.b16 %v1770, %v1769
        %v1781 = vpack.c.b16 %v1772, %v1771
        %v1782 = vpack.c.b16 %v1774, %v1773
        %1791 = vmatprep.subr.bf16.mxu0 0
        %1792 = vmatpush1.bf16.msra.mxu0 %v1775
        %1793 = vmatprep.subr.bf16.mxu0 0
        %1794 = vmatpush1.bf16.msra.mxu0 %v1776
        %1795 = vmatprep.subr.bf16.mxu0 0
        %1796 = vmatpush1.bf16.msra.mxu0 %v1777
        %1797 = vmatprep.subr.bf16.mxu0 0
        %1798 = vmatpush1.bf16.msra.mxu0 %v1778
        %1799 = vmatprep.subr.bf16.mxu0 0
        %1800 = vmatpush1.bf16.msra.mxu0 %v1779
        %1801 = vmatprep.subr.bf16.mxu0 0
        %1802 = vmatpush1.bf16.msra.mxu0 %v1780
        %1803 = vmatprep.subr.bf16.mxu0 0
        %1804 = vmatpush1.bf16.msra.mxu0 %v1781
        %1805 = vmatprep.subr.bf16.mxu0 0
        %1806 = vmatpush1.bf16.msra.mxu0 %v1782
        %1807 = vmatprep.subr.bf16.mxu0 0
        %1808 = vmatpush1.bf16.msra.mxu0 0
        %1809 = vmatprep.subr.bf16.mxu0 0
        %1810 = vmatpush1.bf16.msra.mxu0 0
        %1811 = vmatprep.subr.bf16.mxu0 0
        %1812 = vmatpush1.bf16.msra.mxu0 0
        %1813 = vmatprep.subr.bf16.mxu0 0
        %1814 = vmatpush1.bf16.msra.mxu0 0
        %1815 = vmatprep.subr.bf16.mxu0 0
        %1816 = vmatpush1.bf16.msra.mxu0 0
        %1817 = vmatprep.subr.bf16.mxu0 0
        %1818 = vmatpush1.bf16.msra.mxu0 0
        %1819 = vmatprep.subr.bf16.mxu0 0
        %1820 = vmatpush1.bf16.msra.mxu0 0
        %1821 = vmatprep.subr.bf16.mxu0 0
        %1822 = vmatpush1.bf16.msra.mxu0 0
        %1823 = vmatprep.mubr.bf16.mxu0 0
        %1824 = vmatmul.mubr.bf16.gmra.mrb[0].mxu0 %v1719
        %v1825 = vpop.f32.mrb[0].mxu0
        %v1826 = vadd.f32 %v1741, %v1825
        %v1827 = vpop.f32.mrb[0].mxu0
        %v1828 = vpop.f32.mrb[0].mxu0
        %v1829 = vpop.f32.mrb[0].mxu0
        %1830 = vdwg.mxu0
        %v1831 = vadd.f32 %v1613, %v1826
        %1832 = vst.msk [vmem:[%s499] sm:$0xff] %vm651, %v1831
        %s1833 = sand.u32 %s371, 1
        %s1834 = scalar_lea.sflag [#allocation8], %s1833
        %s1835 = sand.u32 %s371, 1
        %s1836 = smul.addr %s1835, 8
        %s1837 = scalar_lea.vmem [#allocation7], %s1836
        // Predicated region
        $region113: #{tpu_custom_call.1} parent=79 // pred_check
          %p1838 = pneg %p381
        $region114: #{tpu_custom_call.1} parent=79 // pred_check_branch
          %1840 = sbr.rel (%p1838) target = $region116
        $region115: #{tpu_custom_call.1} parent=79 // pred_region
          %s1842 = ssub.s32 128, 128
          %1843 = vsyncadd %s1834, %s1842
          %s1844 = sadd.s32 %s34, %s33
          %s1845 = smul.addr %s1844, 128
          %s1846 = scalar_lea.hbm %s15, %s1845
          %s1848 = sshll.u32 %s1837, 4
          %s1849 = int_to_ptr.vmem [resolvable:$true] %s1848
          %1851 = dma.vmem_to_hbm [thread:$0]  %s1849, 128, %s1846, %s1834
        $region116: #{tpu_custom_call.1} parent=79 // pred_fallthru
          _
      $region80: #{tpu_custom_call.1} parent=5 // pred_fallthru
        _
      %p1852 = scmp.le.s32.totalorder 2, %s24
      // Predicated region
      $region117: #{tpu_custom_call.1} parent=5 // pred_check
        %p1853 = pneg %p1852
      $region118: #{tpu_custom_call.1} parent=5 // pred_check_branch
        %1855 = sbr.rel (%p1853) target = $region120
      $region119: #{tpu_custom_call.1} parent=5 // pred_region
        %s1856 = ssub.s32 %s24, 2
        // Predicated region
        $region121: #{tpu_custom_call.1} parent=119 // pred_check
          %p1857 = pneg %p387
        $region122: #{tpu_custom_call.1} parent=119 // pred_check_branch
          %1859 = sbr.rel (%p1857) target = $region124
        $region123: #{tpu_custom_call.1} parent=119 // pred_region
          %s1860 = sand.u32 %s372, 1
          %s1861 = scalar_lea.sflag [#allocation8], %s1860
          %s1862 = sand.u32 %s372, 1
          %s1863 = smul.addr %s1862, 8
          %s1864 = scalar_lea.vmem [#allocation7], %s1863
          %1865 = dma.done %s1861, 128
        $region124: #{tpu_custom_call.1} parent=119 // pred_fallthru
          _
      $region120: #{tpu_custom_call.1} parent=5 // pred_fallthru
        _
    $region6: #{tpu_custom_call.1} parent=1 // loop_footer
      %s28 = sadd.s32 1, %s24
    $region7: #{tpu_custom_call.1} parent=1 // loop_footer_branch
      %23 = sbr.rel target = $region3
    $region8: #{tpu_custom_call.1} parent=1 // loop_exit
      _
    %1866 = vsyncpa [#allocation8], 1
    %s1867 = scalar_lea.sflag [#allocation8], 1
    %1868 = vsyncpa %s1867, 1

</llo_original>
